<compile_context>
chip_gen: v6e
topology: v6e:2x2x1
jax: 0.10.0
libtpu: 0.0.40
codegen_flags: <defaults>
</compile_context>

<pallas_src>
import functools

import jax
import jax.numpy as jnp
from jax import lax
from jax.experimental import pallas as pl
from jax.experimental.pallas import tpu as pltpu


def _sigmoid(v):
    # exact sigmoid; exp + divide both run on the EUP slot
    return 1.0 / (1.0 + jnp.exp(-v))


def _silu(v):
    return v * _sigmoid(v)


# --------------------------- fully fused Cobra stack kernel ---------------------------

def _cobra_stack_kernel(x_ref, g_ref, beta_ref,
                        w_proj_ref, b_proj_ref,
                        wc0_ref, wc1_ref, wc2_ref, b_conv_ref,
                        w_delta_ref, w_b_ref, w_c_ref, w_dt_ref, b_dt_ref,
                        a_neg_ref, d_ref,
                        o_ref, act_ref, *, bb, seq):
    layer = pl.program_id(1)
    m, d = act_ref.shape            # m = bb * seq
    n = a_neg_ref.shape[0]

    g = g_ref[...]                  # (1, D) LayerNorm gamma
    beta = beta_ref[...]            # (1, D) LayerNorm beta

    def layernorm(v):
        mu = jnp.mean(v, axis=-1, keepdims=True)
        var = jnp.mean((v - mu) * (v - mu), axis=-1, keepdims=True)
        return (v - mu) * lax.rsqrt(var + 1e-5) * g + beta

    # prologue: model-level pre-LayerNorm of the embedded tokens (only at the first layer)
    @pl.when(layer == 0)
    def _():
        act_ref[...] = layernorm(x_ref[...])

    x = act_ref[...]                # (M, D) f32 block input; also the skip connection
    w_proj = w_proj_ref[...]        # (D, D) bf16
    b_proj = b_proj_ref[...]        # (1, D) f32

    # nn.Linear proj (the reference applies the same layer to x twice -> identical result)
    xp = jnp.dot(x.astype(jnp.bfloat16), w_proj,
                 preferred_element_type=jnp.float32) + b_proj                # (M, D)

    # Conv1d(k=3, pad=1) over the channel axis S, length axis D:
    # taps built with XLU lane rolls + edge masks, contracted with per-tap block-diagonal
    # (over the bb folded batch elements) weights in three small MXU dots.
    lane = lax.broadcasted_iota(jnp.int32, (m, d), 1)
    left = jnp.where(lane == 0, 0.0, pltpu.roll(xp, shift=1, axis=1))        # xpad[:, l]
    right = jnp.where(lane == d - 1, 0.0, pltpu.roll(xp, shift=d - 1, axis=1))  # xpad[:, l+2]
    xc = (jnp.dot(wc0_ref[...], left.astype(jnp.bfloat16),
                  preferred_element_type=jnp.float32)
          + jnp.dot(wc1_ref[...], xp.astype(jnp.bfloat16),
                    preferred_element_type=jnp.float32)
          + jnp.dot(wc2_ref[...], right.astype(jnp.bfloat16),
                    preferred_element_type=jnp.float32)
          + b_conv_ref[...])                                                 # (M, D)
    x_one = _silu(xc)

    # deltaBC (bias-less, weight pre-split in the wrapper) + dt_proj + stable softplus
    x1_16 = x_one.astype(jnp.bfloat16)
    delta_r = jnp.dot(x1_16, w_delta_ref[...], preferred_element_type=jnp.float32)  # (M, R)
    bmat = jnp.dot(x1_16, w_b_ref[...], preferred_element_type=jnp.float32)         # (M, N)
    cmat = jnp.dot(x1_16, w_c_ref[...], preferred_element_type=jnp.float32)         # (M, N)
    dl = jnp.dot(delta_r.astype(jnp.bfloat16), w_dt_ref[...],
                 preferred_element_type=jnp.float32) + b_dt_ref[...]                # (M, D)
    delta = jnp.maximum(dl, 0.0) + jnp.log(1.0 + jnp.exp(-jnp.abs(dl)))

    a_neg = a_neg_ref[...]          # (N, D) == (-exp(A_log)).T, precomputed in the wrapper
    d_par = d_ref[...]              # (1, D)

    # Selective scan (f32): unrolled over seq, exp(dt*A)/dt*B*x computed on the fly, and the
    # output row emitted inside the recurrence (no (T,N,D) hs stack -> no spills).
    delta3 = delta.reshape(bb, seq, d)
    x3 = x_one.reshape(bb, seq, d)
    b3 = bmat.reshape(bb, seq, n)
    c3 = cmat.reshape(bb, seq, n)
    h = jnp.zeros((bb, n, d), jnp.float32)
    ys = []
    for t in range(seq):
        dt_t = delta3[:, t, :]                                               # (bb, D)
        da = jnp.exp(dt_t[:, None, :] * a_neg[None, :, :])                   # (bb, N, D)
        dbx = (dt_t * x3[:, t, :])[:, None, :] * b3[:, t, :][:, :, None]     # (bb, N, D)
        h = da * h + dbx
        ys.append(jnp.sum(c3[:, t, :][:, :, None] * h, axis=1))              # (bb, D)
    y = jnp.stack(ys, axis=1).reshape(m, d) + d_par * x_one                  # (M, D)

    # gate * SiLU(x_two) + skip, then the final nn.Linear proj (same weights again)
    comb = y * _silu(xp) + x
    new = jnp.dot(comb.astype(jnp.bfloat16), w_proj,
                  preferred_element_type=jnp.float32) + b_proj
    act_ref[...] = new              # carry to the next depth step (stays in VMEM)

    # epilogue: model-level post-LayerNorm, written only once per batch block
    @pl.when(layer == pl.num_programs(1) - 1)
    def _():
        o_ref[...] = layernorm(new)


# ------------------------------------ model glue --------------------------------------

def cobra_forward(tokens, p, *, batch_block=None):
    emb = jnp.take(p["embed"], tokens, axis=0)        # (B, S, dim) embedding gather (glue)
    bsz, s, d = emb.shape
    depth = p["w_proj"].shape[0]
    n = p["a_neg"].shape[1]
    r = p["w_dt"].shape[1]

    # Fold batch into the matmul M dim, but keep >= 2 batch grid steps (v7x: 2 TensorCores).
    if batch_block is None:
        batch_block = bsz // 2 if (bsz >= 2 and bsz % 2 == 0) else 1
    bb = batch_block
    assert bsz % bb == 0
    nb = bsz // bb
    m = bb * s

    # Per-tap block-diagonal conv weights so the conv contraction also covers the folded batch.
    eye = jnp.eye(bb, dtype=p["w_conv"].dtype)
    wc = jnp.einsum("ab,lkpq->lkapbq", eye, p["w_conv"]).reshape(depth, 3, m, m)
    wc0, wc1, wc2 = wc[:, 0], wc[:, 1], wc[:, 2]
    b_conv = jnp.tile(p["b_conv"], (1, bb, 1))        # (L, bb*S, 1)

    x_flat = emb.reshape(bsz * s, d)

    wmap = lambda b, l: (l, 0, 0)                     # per-layer weights, streamed over depth
    cmap = lambda b, l: (0, 0)                        # grid-invariant (resident in VMEM)
    xmap = lambda b, l: (b, 0)                        # per-batch-block activations

    kernel = functools.partial(_cobra_stack_kernel, bb=bb, seq=s)
    out = pl.pallas_call(
        kernel,
        out_shape=jax.ShapeDtypeStruct((bsz * s, d), jnp.float32),
        grid=(nb, depth),
        in_specs=[
            pl.BlockSpec((m, d), xmap),               # embedded tokens (pre-LN'd at layer 0)
            pl.BlockSpec((1, d), cmap),               # LayerNorm gamma
            pl.BlockSpec((1, d), cmap),               # LayerNorm beta
            pl.BlockSpec((None, d, d), wmap),         # w_proj (bf16)
            pl.BlockSpec((None, 1, d), wmap),         # b_proj
            pl.BlockSpec((None, m, m), wmap),         # conv tap 0 (block-diag over bb, bf16)
            pl.BlockSpec((None, m, m), wmap),         # conv tap 1
            pl.BlockSpec((None, m, m), wmap),         # conv tap 2
            pl.BlockSpec((None, m, 1), wmap),         # conv bias
            pl.BlockSpec((None, d, r), wmap),         # deltaBC weight, delta slice (bf16)
            pl.BlockSpec((None, d, n), wmap),         # deltaBC weight, B slice (bf16)
            pl.BlockSpec((None, d, n), wmap),         # deltaBC weight, C slice (bf16)
            pl.BlockSpec((None, r, d), wmap),         # dt_proj weight (bf16)
            pl.BlockSpec((None, 1, d), wmap),         # dt_proj bias
            pl.BlockSpec((None, n, d), wmap),         # -exp(A_log).T
            pl.BlockSpec((None, 1, d), wmap),         # D
        ],
        out_specs=pl.BlockSpec((m, d), xmap),
        scratch_shapes=[pltpu.VMEM((m, d), jnp.float32)],   # activation carried across depth
        compiler_params=pltpu.CompilerParams(
            dimension_semantics=("parallel", "arbitrary")),
    )(x_flat, p["ln_g"], p["ln_b"], p["w_proj"], p["b_proj"],
      wc0, wc1, wc2, b_conv,
      p["w_delta"], p["w_b"], p["w_c"], p["w_dt"], p["b_dt"],
      p["a_neg"], p["D"])
    return out.reshape(bsz, s, d)


def init_params(key, *, dim, dt_rank, dim_inner, d_state, channels, num_tokens, depth):
    assert dim == dim_inner, "reference model requires dim == dim_inner"
    L, D, S, N, R = depth, dim, channels, d_state, dt_rank
    k = jax.random.split(key, 8)
    s_lin = 1.0 / (D ** 0.5)
    s_conv = 1.0 / ((S * 3) ** 0.5)
    s_dt = 1.0 / (R ** 0.5)

    w_dbc = jax.random.uniform(k[4], (L, D, R + 2 * N), jnp.float32, -s_lin, s_lin)
    # A_log = log(arange(1, N+1)) repeated over dim_inner (same init for every layer)
    a_log = jnp.log(jnp.tile(jnp.arange(1, N + 1, dtype=jnp.float32)[None, :], (D, 1)))  # (D, N)
    a_neg = jnp.tile((-jnp.exp(a_log)).T[None], (L, 1, 1))                               # (L, N, D)

    return {
        "embed": jax.random.normal(k[0], (num_tokens, D), jnp.float32) * 0.02,
        "ln_g": jnp.ones((1, D), jnp.float32),
        "ln_b": jnp.zeros((1, D), jnp.float32),
        # proj is applied as x @ W (transpose of torch's x @ W.T); self-consistent random init.
        "w_proj": jax.random.uniform(k[1], (L, D, D), jnp.float32, -s_lin, s_lin
                                     ).astype(jnp.bfloat16),
        "b_proj": jax.random.uniform(k[2], (L, 1, D), jnp.float32, -s_lin, s_lin),
        "w_conv": jax.random.uniform(k[3], (L, 3, S, S), jnp.float32, -s_conv, s_conv
                                     ).astype(jnp.bfloat16),
        "b_conv": jax.random.uniform(k[5], (L, S, 1), jnp.float32, -s_conv, s_conv),
        "w_delta": w_dbc[:, :, :R].astype(jnp.bfloat16),
        "w_b": w_dbc[:, :, R:R + N].astype(jnp.bfloat16),
        "w_c": w_dbc[:, :, R + N:].astype(jnp.bfloat16),
        "w_dt": jax.random.uniform(k[6], (L, R, D), jnp.float32, -s_dt, s_dt
                                   ).astype(jnp.bfloat16),
        "b_dt": jax.random.uniform(k[7], (L, 1, D), jnp.float32, -s_dt, s_dt),
        "a_neg": a_neg,
        "D": jnp.ones((L, 1, D), jnp.float32),
    }


if __name__ == "__main__":
    # small shapes consistent with the module (dim == dim_inner, seq == channels);
    # dim is a multiple of 128 so the lane axis is dense.
    dim, dt_rank, dim_inner, d_state = 128, 8, 128, 16
    channels, num_tokens, depth = 8, 100, 2
    batch, seq = 2, channels

    key = jax.random.PRNGKey(0)
    pkey, tkey = jax.random.split(key)
    params = init_params(pkey, dim=dim, dt_rank=dt_rank, dim_inner=dim_inner,
                         d_state=d_state, channels=channels,
                         num_tokens=num_tokens, depth=depth)
    tokens = jax.random.randint(tkey, (batch, seq), 0, num_tokens, dtype=jnp.int32)

    fwd = jax.jit(cobra_forward)
    out = fwd(tokens, params)
    jax.block_until_ready(out)

    assert out.shape == (batch, seq, dim)
    assert bool(jnp.all(jnp.isfinite(out)))
    print("KERNEL_OK")
</pallas_src>

<mosaic_0001>
module attributes {stable_mosaic.version = 11 : i64} {
  func.func @_cobra_stack_kernel(%arg0: i32, %arg1: i32, %arg2: memref<8x128xf32, #tpu.memory_space<vmem>>, %arg3: memref<1x128xf32, #tpu.memory_space<vmem>>, %arg4: memref<1x128xf32, #tpu.memory_space<vmem>>, %arg5: memref<1x128x128xbf16, #tpu.memory_space<vmem>>, %arg6: memref<1x1x128xf32, #tpu.memory_space<vmem>>, %arg7: memref<1x8x8xbf16, #tpu.memory_space<vmem>>, %arg8: memref<1x8x8xbf16, #tpu.memory_space<vmem>>, %arg9: memref<1x8x8xbf16, #tpu.memory_space<vmem>>, %arg10: memref<1x8x1xf32, #tpu.memory_space<vmem>>, %arg11: memref<1x128x8xbf16, #tpu.memory_space<vmem>>, %arg12: memref<1x128x16xbf16, #tpu.memory_space<vmem>>, %arg13: memref<1x128x16xbf16, #tpu.memory_space<vmem>>, %arg14: memref<1x8x128xbf16, #tpu.memory_space<vmem>>, %arg15: memref<1x1x128xf32, #tpu.memory_space<vmem>>, %arg16: memref<1x16x128xf32, #tpu.memory_space<vmem>>, %arg17: memref<1x1x128xf32, #tpu.memory_space<vmem>>, %arg18: memref<8x128xf32, #tpu.memory_space<vmem>>, %arg19: memref<8x128xf32, #tpu.memory_space<vmem>>) attributes {dimension_semantics = [#tpu.dimension_semantics<parallel>, #tpu.dimension_semantics<arbitrary>], iteration_bounds = array<i64: 2, 2>, scalar_prefetch = 0 : i64, scratch_operands = 1 : i64, tpu.core_type = #tpu.core_type<tc>, window_params = [{transform_indices = @transform_0, window_bounds = array<i64: 8, 128>}, {pipeline_mode = #tpu.pipeline_mode<synchronous>, transform_indices = @transform_1, window_bounds = array<i64: 1, 128>}, {pipeline_mode = #tpu.pipeline_mode<synchronous>, transform_indices = @transform_2, window_bounds = array<i64: 1, 128>}, {transform_indices = @transform_3, window_bounds = array<i64: 1, 128, 128>}, {transform_indices = @transform_4, window_bounds = array<i64: 1, 1, 128>}, {transform_indices = @transform_5, window_bounds = array<i64: 1, 8, 8>}, {transform_indices = @transform_6, window_bounds = array<i64: 1, 8, 8>}, {transform_indices = @transform_7, window_bounds = array<i64: 1, 8, 8>}, {transform_indices = @transform_8, window_bounds = array<i64: 1, 8, 1>}, {transform_indices = @transform_9, window_bounds = array<i64: 1, 128, 8>}, {transform_indices = @transform_10, window_bounds = array<i64: 1, 128, 16>}, {transform_indices = @transform_11, window_bounds = array<i64: 1, 128, 16>}, {transform_indices = @transform_12, window_bounds = array<i64: 1, 8, 128>}, {transform_indices = @transform_13, window_bounds = array<i64: 1, 1, 128>}, {transform_indices = @transform_14, window_bounds = array<i64: 1, 16, 128>}, {transform_indices = @transform_15, window_bounds = array<i64: 1, 1, 128>}, {transform_indices = @transform_16, window_bounds = array<i64: 8, 128>}]} {
    %c0 = arith.constant 0 : index
    %c0_0 = arith.constant 0 : index
    %0 = vector.load %arg3[%c0, %c0_0] : memref<1x128xf32, #tpu.memory_space<vmem>>, vector<1x128xf32>
    %c0_1 = arith.constant 0 : index
    %c0_2 = arith.constant 0 : index
    %1 = vector.load %arg4[%c0_1, %c0_2] : memref<1x128xf32, #tpu.memory_space<vmem>>, vector<1x128xf32>
    %c0_i32 = arith.constant 0 : i32
    %2 = arith.cmpi eq, %arg1, %c0_i32 : i32
    %3 = arith.extui %2 : i1 to i32
    %c0_i32_3 = arith.constant 0 : i32
    %4 = arith.cmpi ne, %3, %c0_i32_3 : i32
    scf.if %4 {
      %c0_79 = arith.constant 0 : index
      %c0_80 = arith.constant 0 : index
      %319 = vector.load %arg2[%c0_79, %c0_80] : memref<8x128xf32, #tpu.memory_space<vmem>>, vector<8x128xf32>
      %cst_81 = arith.constant dense<0.000000e+00> : vector<8xf32>
      %320 = vector.multi_reduction <add>, %319, %cst_81 [1] : vector<8x128xf32> to vector<8xf32>
      %321 = vector.shape_cast %320 : vector<8xf32> to vector<8x1xf32>
      %cst_82 = arith.constant 1.280000e+02 : f32
      %322 = vector.broadcast %cst_82 : f32 to vector<8x1xf32>
      %323 = arith.divf %321, %322 : vector<8x1xf32>
      %324 = vector.broadcast %323 : vector<8x1xf32> to vector<8x128xf32>
      %325 = arith.subf %319, %324 : vector<8x128xf32>
      %326 = vector.broadcast %323 : vector<8x1xf32> to vector<8x128xf32>
      %327 = arith.subf %319, %326 : vector<8x128xf32>
      %328 = arith.mulf %325, %327 : vector<8x128xf32>
      %cst_83 = arith.constant dense<0.000000e+00> : vector<8xf32>
      %329 = vector.multi_reduction <add>, %328, %cst_83 [1] : vector<8x128xf32> to vector<8xf32>
      %330 = vector.shape_cast %329 : vector<8xf32> to vector<8x1xf32>
      %cst_84 = arith.constant 1.280000e+02 : f32
      %331 = vector.broadcast %cst_84 : f32 to vector<8x1xf32>
      %332 = arith.divf %330, %331 : vector<8x1xf32>
      %333 = vector.broadcast %323 : vector<8x1xf32> to vector<8x128xf32>
      %334 = arith.subf %319, %333 : vector<8x128xf32>
      %cst_85 = arith.constant 9.99999974E-6 : f32
      %335 = vector.broadcast %cst_85 : f32 to vector<8x1xf32>
      %336 = arith.addf %332, %335 : vector<8x1xf32>
      %337 = math.rsqrt %336 : vector<8x1xf32>
      %338 = vector.broadcast %337 : vector<8x1xf32> to vector<8x128xf32>
      %339 = arith.mulf %334, %338 : vector<8x128xf32>
      %340 = vector.broadcast %0 : vector<1x128xf32> to vector<8x128xf32>
      %341 = arith.mulf %339, %340 : vector<8x128xf32>
      %342 = vector.broadcast %1 : vector<1x128xf32> to vector<8x128xf32>
      %343 = arith.addf %341, %342 : vector<8x128xf32>
      %c0_86 = arith.constant 0 : index
      %c0_87 = arith.constant 0 : index
      %344 = vector.load %arg19[%c0_86, %c0_87] : memref<8x128xf32, #tpu.memory_space<vmem>>, vector<8x128xf32>
      tpu.vector_store %arg19[%c0_86, %c0_87], %343 {strides = array<i32>} : memref<8x128xf32, #tpu.memory_space<vmem>>, vector<8x128xf32>,
    } else {
    }
    %c0_4 = arith.constant 0 : index
    %c0_5 = arith.constant 0 : index
    %5 = vector.load %arg19[%c0_4, %c0_5] : memref<8x128xf32, #tpu.memory_space<vmem>>, vector<8x128xf32>
    %c0_6 = arith.constant 0 : index
    %c0_7 = arith.constant 0 : index
    %c0_8 = arith.constant 0 : index
    %6 = vector.load %arg5[%c0_6, %c0_7, %c0_8] : memref<1x128x128xbf16, #tpu.memory_space<vmem>>, vector<1x128x128xbf16>
    %7 = vector.shape_cast %6 : vector<1x128x128xbf16> to vector<128x128xbf16>
    %c0_9 = arith.constant 0 : index
    %c0_10 = arith.constant 0 : index
    %c0_11 = arith.constant 0 : index
    %8 = vector.load %arg6[%c0_9, %c0_10, %c0_11] : memref<1x1x128xf32, #tpu.memory_space<vmem>>, vector<1x1x128xf32>
    %9 = vector.shape_cast %8 : vector<1x1x128xf32> to vector<1x128xf32>
    %10 = arith.truncf %5 : vector<8x128xf32> to vector<8x128xbf16>
    %cst = arith.constant dense<0.000000e+00> : vector<8x128xf32>
    %11 = tpu.matmul %10, %7, %cst {dimension_numbers = #tpu.dot_dimension_numbers<[1], [0], [0], [1], [0, 0, 1, 1], [], []>} : vector<8x128xbf16>, vector<128x128xbf16>, vector<8x128xf32> -> vector<8x128xf32>
    %12 = vector.broadcast %9 : vector<1x128xf32> to vector<8x128xf32>
    %13 = arith.addf %11, %12 : vector<8x128xf32>
    %14 = tpu.iota {dimensions = array<i32: 1>} : vector<8x128xi32>
    %c0_i32_12 = arith.constant 0 : i32
    %15 = vector.broadcast %c0_i32_12 : i32 to vector<8x128xi32>
    %16 = arith.cmpi eq, %14, %15 : vector<8x128xi32>
    %c1_i32 = arith.constant 1 : i32
    %17 = tpu.dynamic_rotate %13 by %c1_i32 dim 1 : vector<8x128xf32>, i32 -> vector<8x128xf32>
    %cst_13 = arith.constant 0.000000e+00 : f32
    %18 = vector.broadcast %cst_13 : f32 to vector<8x128xf32>
    %19 = arith.select %16, %18, %17 : vector<8x128xi1>, vector<8x128xf32>
    %c127_i32 = arith.constant 127 : i32
    %20 = vector.broadcast %c127_i32 : i32 to vector<8x128xi32>
    %21 = arith.cmpi eq, %14, %20 : vector<8x128xi32>
    %c127_i32_14 = arith.constant 127 : i32
    %22 = tpu.dynamic_rotate %13 by %c127_i32_14 dim 1 : vector<8x128xf32>, i32 -> vector<8x128xf32>
    %cst_15 = arith.constant 0.000000e+00 : f32
    %23 = vector.broadcast %cst_15 : f32 to vector<8x128xf32>
    %24 = arith.select %21, %23, %22 : vector<8x128xi1>, vector<8x128xf32>
    %c0_16 = arith.constant 0 : index
    %c0_17 = arith.constant 0 : index
    %c0_18 = arith.constant 0 : index
    %25 = vector.load %arg7[%c0_16, %c0_17, %c0_18] : memref<1x8x8xbf16, #tpu.memory_space<vmem>>, vector<1x8x8xbf16>
    %26 = vector.shape_cast %25 : vector<1x8x8xbf16> to vector<8x8xbf16>
    %27 = arith.truncf %19 : vector<8x128xf32> to vector<8x128xbf16>
    %cst_19 = arith.constant dense<0.000000e+00> : vector<8x128xf32>
    %28 = tpu.matmul %26, %27, %cst_19 {dimension_numbers = #tpu.dot_dimension_numbers<[1], [0], [0], [1], [0, 0, 1, 1], [], []>} : vector<8x8xbf16>, vector<8x128xbf16>, vector<8x128xf32> -> vector<8x128xf32>
    %c0_20 = arith.constant 0 : index
    %c0_21 = arith.constant 0 : index
    %c0_22 = arith.constant 0 : index
    %29 = vector.load %arg8[%c0_20, %c0_21, %c0_22] : memref<1x8x8xbf16, #tpu.memory_space<vmem>>, vector<1x8x8xbf16>
    %30 = vector.shape_cast %29 : vector<1x8x8xbf16> to vector<8x8xbf16>
    %31 = arith.truncf %13 : vector<8x128xf32> to vector<8x128xbf16>
    %cst_23 = arith.constant dense<0.000000e+00> : vector<8x128xf32>
    %32 = tpu.matmul %30, %31, %cst_23 {dimension_numbers = #tpu.dot_dimension_numbers<[1], [0], [0], [1], [0, 0, 1, 1], [], []>} : vector<8x8xbf16>, vector<8x128xbf16>, vector<8x128xf32> -> vector<8x128xf32>
    %33 = arith.addf %28, %32 : vector<8x128xf32>
    %c0_24 = arith.constant 0 : index
    %c0_25 = arith.constant 0 : index
    %c0_26 = arith.constant 0 : index
    %34 = vector.load %arg9[%c0_24, %c0_25, %c0_26] : memref<1x8x8xbf16, #tpu.memory_space<vmem>>, vector<1x8x8xbf16>
    %35 = vector.shape_cast %34 : vector<1x8x8xbf16> to vector<8x8xbf16>
    %36 = arith.truncf %24 : vector<8x128xf32> to vector<8x128xbf16>
    %cst_27 = arith.constant dense<0.000000e+00> : vector<8x128xf32>
    %37 = tpu.matmul %35, %36, %cst_27 {dimension_numbers = #tpu.dot_dimension_numbers<[1], [0], [0], [1], [0, 0, 1, 1], [], []>} : vector<8x8xbf16>, vector<8x128xbf16>, vector<8x128xf32> -> vector<8x128xf32>
    %38 = arith.addf %33, %37 : vector<8x128xf32>
    %c0_28 = arith.constant 0 : index
    %c0_29 = arith.constant 0 : index
    %c0_30 = arith.constant 0 : index
    %39 = vector.load %arg10[%c0_28, %c0_29, %c0_30] : memref<1x8x1xf32, #tpu.memory_space<vmem>>, vector<1x8x1xf32>
    %40 = vector.shape_cast %39 : vector<1x8x1xf32> to vector<8x1xf32>
    %41 = vector.broadcast %40 : vector<8x1xf32> to vector<8x128xf32>
    %42 = arith.addf %38, %41 : vector<8x128xf32>
    %cst_31 = arith.constant 0.000000e+00 : f32
    %43 = vector.broadcast %cst_31 : f32 to vector<8x128xf32>
    %44 = arith.subf %43, %42 : vector<8x128xf32>
    %45 = math.exp %44 : vector<8x128xf32>
    %cst_32 = arith.constant 1.000000e+00 : f32
    %46 = vector.broadcast %cst_32 : f32 to vector<8x128xf32>
    %47 = arith.addf %46, %45 : vector<8x128xf32>
    %cst_33 = arith.constant 1.000000e+00 : f32
    %48 = vector.broadcast %cst_33 : f32 to vector<8x128xf32>
    %49 = arith.divf %48, %47 : vector<8x128xf32>
    %50 = arith.mulf %42, %49 : vector<8x128xf32>
    %51 = arith.truncf %50 : vector<8x128xf32> to vector<8x128xbf16>
    %c0_34 = arith.constant 0 : index
    %c0_35 = arith.constant 0 : index
    %c0_36 = arith.constant 0 : index
    %52 = vector.load %arg11[%c0_34, %c0_35, %c0_36] : memref<1x128x8xbf16, #tpu.memory_space<vmem>>, vector<1x128x8xbf16>
    %53 = vector.shape_cast %52 : vector<1x128x8xbf16> to vector<128x8xbf16>
    %cst_37 = arith.constant dense<0.000000e+00> : vector<8x8xf32>
    %54 = tpu.matmul %51, %53, %cst_37 {dimension_numbers = #tpu.dot_dimension_numbers<[1], [0], [0], [1], [0, 0, 1, 1], [], []>} : vector<8x128xbf16>, vector<128x8xbf16>, vector<8x8xf32> -> vector<8x8xf32>
    %c0_38 = arith.constant 0 : index
    %c0_39 = arith.constant 0 : index
    %c0_40 = arith.constant 0 : index
    %55 = vector.load %arg12[%c0_38, %c0_39, %c0_40] : memref<1x128x16xbf16, #tpu.memory_space<vmem>>, vector<1x128x16xbf16>
    %56 = vector.shape_cast %55 : vector<1x128x16xbf16> to vector<128x16xbf16>
    %cst_41 = arith.constant dense<0.000000e+00> : vector<8x16xf32>
    %57 = tpu.matmul %51, %56, %cst_41 {dimension_numbers = #tpu.dot_dimension_numbers<[1], [0], [0], [1], [0, 0, 1, 1], [], []>} : vector<8x128xbf16>, vector<128x16xbf16>, vector<8x16xf32> -> vector<8x16xf32>
    %c0_42 = arith.constant 0 : index
    %c0_43 = arith.constant 0 : index
    %c0_44 = arith.constant 0 : index
    %58 = vector.load %arg13[%c0_42, %c0_43, %c0_44] : memref<1x128x16xbf16, #tpu.memory_space<vmem>>, vector<1x128x16xbf16>
    %59 = vector.shape_cast %58 : vector<1x128x16xbf16> to vector<128x16xbf16>
    %cst_45 = arith.constant dense<0.000000e+00> : vector<8x16xf32>
    %60 = tpu.matmul %51, %59, %cst_45 {dimension_numbers = #tpu.dot_dimension_numbers<[1], [0], [0], [1], [0, 0, 1, 1], [], []>} : vector<8x128xbf16>, vector<128x16xbf16>, vector<8x16xf32> -> vector<8x16xf32>
    %61 = arith.truncf %54 : vector<8x8xf32> to vector<8x8xbf16>
    %c0_46 = arith.constant 0 : index
    %c0_47 = arith.constant 0 : index
    %c0_48 = arith.constant 0 : index
    %62 = vector.load %arg14[%c0_46, %c0_47, %c0_48] : memref<1x8x128xbf16, #tpu.memory_space<vmem>>, vector<1x8x128xbf16>
    %63 = vector.shape_cast %62 : vector<1x8x128xbf16> to vector<8x128xbf16>
    %cst_49 = arith.constant dense<0.000000e+00> : vector<8x128xf32>
    %64 = tpu.matmul %61, %63, %cst_49 {dimension_numbers = #tpu.dot_dimension_numbers<[1], [0], [0], [1], [0, 0, 1, 1], [], []>} : vector<8x8xbf16>, vector<8x128xbf16>, vector<8x128xf32> -> vector<8x128xf32>
    %c0_50 = arith.constant 0 : index
    %c0_51 = arith.constant 0 : index
    %c0_52 = arith.constant 0 : index
    %65 = vector.load %arg15[%c0_50, %c0_51, %c0_52] : memref<1x1x128xf32, #tpu.memory_space<vmem>>, vector<1x1x128xf32>
    %66 = vector.shape_cast %65 : vector<1x1x128xf32> to vector<1x128xf32>
    %67 = vector.broadcast %66 : vector<1x128xf32> to vector<8x128xf32>
    %68 = arith.addf %64, %67 : vector<8x128xf32>
    %cst_53 = arith.constant 0.000000e+00 : f32
    %69 = vector.broadcast %cst_53 : f32 to vector<8x128xf32>
    %70 = arith.maximumf %68, %69 : vector<8x128xf32>
    %71 = math.absf %68 : vector<8x128xf32>
    %cst_54 = arith.constant 0.000000e+00 : f32
    %72 = vector.broadcast %cst_54 : f32 to vector<8x128xf32>
    %73 = arith.subf %72, %71 : vector<8x128xf32>
    %74 = math.exp %73 : vector<8x128xf32>
    %cst_55 = arith.constant 1.000000e+00 : f32
    %75 = vector.broadcast %cst_55 : f32 to vector<8x128xf32>
    %76 = arith.addf %75, %74 : vector<8x128xf32>
    %77 = math.log %76 : vector<8x128xf32>
    %78 = arith.addf %70, %77 : vector<8x128xf32>
    %c0_56 = arith.constant 0 : index
    %c0_57 = arith.constant 0 : index
    %c0_58 = arith.constant 0 : index
    %79 = vector.load %arg16[%c0_56, %c0_57, %c0_58] : memref<1x16x128xf32, #tpu.memory_space<vmem>>, vector<1x16x128xf32>
    %80 = vector.shape_cast %79 : vector<1x16x128xf32> to vector<16x128xf32>
    %c0_59 = arith.constant 0 : index
    %c0_60 = arith.constant 0 : index
    %c0_61 = arith.constant 0 : index
    %81 = vector.load %arg17[%c0_59, %c0_60, %c0_61] : memref<1x1x128xf32, #tpu.memory_space<vmem>>, vector<1x1x128xf32>
    %82 = vector.shape_cast %81 : vector<1x1x128xf32> to vector<1x128xf32>
    %83 = vector.shape_cast %78 : vector<8x128xf32> to vector<1x8x128xf32>
    %84 = vector.shape_cast %50 : vector<8x128xf32> to vector<1x8x128xf32>
    %85 = vector.shape_cast %57 : vector<8x16xf32> to vector<1x8x16xf32>
    %86 = vector.shape_cast %60 : vector<8x16xf32> to vector<1x8x16xf32>
    %cst_62 = arith.constant 0.000000e+00 : f32
    %87 = vector.broadcast %cst_62 : f32 to vector<1x16x128xf32>
    %88 = vector.extract_strided_slice %83 {offsets = [0, 0, 0], sizes = [1, 1, 128], strides = [1, 1, 1]} : vector<1x8x128xf32> to vector<1x1x128xf32>
    %89 = vector.shape_cast %88 : vector<1x1x128xf32> to vector<1x128xf32>
    %90 = vector.shape_cast %89 : vector<1x128xf32> to vector<1x1x128xf32>
    %91 = vector.shape_cast %80 : vector<16x128xf32> to vector<1x16x128xf32>
    %92 = vector.broadcast %90 : vector<1x1x128xf32> to vector<1x16x128xf32>
    %93 = arith.mulf %92, %91 : vector<1x16x128xf32>
    %94 = math.exp %93 : vector<1x16x128xf32>
    %95 = vector.extract_strided_slice %84 {offsets = [0, 0, 0], sizes = [1, 1, 128], strides = [1, 1, 1]} : vector<1x8x128xf32> to vector<1x1x128xf32>
    %96 = vector.shape_cast %95 : vector<1x1x128xf32> to vector<1x128xf32>
    %97 = arith.mulf %89, %96 : vector<1x128xf32>
    %98 = vector.shape_cast %97 : vector<1x128xf32> to vector<1x1x128xf32>
    %99 = vector.extract_strided_slice %85 {offsets = [0, 0, 0], sizes = [1, 1, 16], strides = [1, 1, 1]} : vector<1x8x16xf32> to vector<1x1x16xf32>
    %100 = vector.shape_cast %99 : vector<1x1x16xf32> to vector<1x16xf32>
    %101 = vector.shape_cast %100 : vector<1x16xf32> to vector<1x16x1xf32>
    %102 = vector.broadcast %98 : vector<1x1x128xf32> to vector<1x16x128xf32>
    %103 = vector.broadcast %101 : vector<1x16x1xf32> to vector<1x16x128xf32>
    %104 = arith.mulf %102, %103 : vector<1x16x128xf32>
    %105 = arith.mulf %94, %87 : vector<1x16x128xf32>
    %106 = arith.addf %105, %104 : vector<1x16x128xf32>
    %107 = vector.extract_strided_slice %86 {offsets = [0, 0, 0], sizes = [1, 1, 16], strides = [1, 1, 1]} : vector<1x8x16xf32> to vector<1x1x16xf32>
    %108 = vector.shape_cast %107 : vector<1x1x16xf32> to vector<1x16xf32>
    %109 = vector.shape_cast %108 : vector<1x16xf32> to vector<1x16x1xf32>
    %110 = vector.broadcast %109 : vector<1x16x1xf32> to vector<1x16x128xf32>
    %111 = arith.mulf %110, %106 : vector<1x16x128xf32>
    %cst_63 = arith.constant dense<0.000000e+00> : vector<1x128xf32>
    %112 = vector.multi_reduction <add>, %111, %cst_63 [1] : vector<1x16x128xf32> to vector<1x128xf32>
    %113 = vector.extract_strided_slice %83 {offsets = [0, 1, 0], sizes = [1, 1, 128], strides = [1, 1, 1]} : vector<1x8x128xf32> to vector<1x1x128xf32>
    %114 = vector.shape_cast %113 : vector<1x1x128xf32> to vector<1x128xf32>
    %115 = vector.shape_cast %114 : vector<1x128xf32> to vector<1x1x128xf32>
    %116 = vector.shape_cast %80 : vector<16x128xf32> to vector<1x16x128xf32>
    %117 = vector.broadcast %115 : vector<1x1x128xf32> to vector<1x16x128xf32>
    %118 = arith.mulf %117, %116 : vector<1x16x128xf32>
    %119 = math.exp %118 : vector<1x16x128xf32>
    %120 = vector.extract_strided_slice %84 {offsets = [0, 1, 0], sizes = [1, 1, 128], strides = [1, 1, 1]} : vector<1x8x128xf32> to vector<1x1x128xf32>
    %121 = vector.shape_cast %120 : vector<1x1x128xf32> to vector<1x128xf32>
    %122 = arith.mulf %114, %121 : vector<1x128xf32>
    %123 = vector.shape_cast %122 : vector<1x128xf32> to vector<1x1x128xf32>
    %124 = vector.extract_strided_slice %85 {offsets = [0, 1, 0], sizes = [1, 1, 16], strides = [1, 1, 1]} : vector<1x8x16xf32> to vector<1x1x16xf32>
    %125 = vector.shape_cast %124 : vector<1x1x16xf32> to vector<1x16xf32>
    %126 = vector.shape_cast %125 : vector<1x16xf32> to vector<1x16x1xf32>
    %127 = vector.broadcast %123 : vector<1x1x128xf32> to vector<1x16x128xf32>
    %128 = vector.broadcast %126 : vector<1x16x1xf32> to vector<1x16x128xf32>
    %129 = arith.mulf %127, %128 : vector<1x16x128xf32>
    %130 = arith.mulf %119, %106 : vector<1x16x128xf32>
    %131 = arith.addf %130, %129 : vector<1x16x128xf32>
    %132 = vector.extract_strided_slice %86 {offsets = [0, 1, 0], sizes = [1, 1, 16], strides = [1, 1, 1]} : vector<1x8x16xf32> to vector<1x1x16xf32>
    %133 = vector.shape_cast %132 : vector<1x1x16xf32> to vector<1x16xf32>
    %134 = vector.shape_cast %133 : vector<1x16xf32> to vector<1x16x1xf32>
    %135 = vector.broadcast %134 : vector<1x16x1xf32> to vector<1x16x128xf32>
    %136 = arith.mulf %135, %131 : vector<1x16x128xf32>
    %cst_64 = arith.constant dense<0.000000e+00> : vector<1x128xf32>
    %137 = vector.multi_reduction <add>, %136, %cst_64 [1] : vector<1x16x128xf32> to vector<1x128xf32>
    %138 = vector.extract_strided_slice %83 {offsets = [0, 2, 0], sizes = [1, 1, 128], strides = [1, 1, 1]} : vector<1x8x128xf32> to vector<1x1x128xf32>
    %139 = vector.shape_cast %138 : vector<1x1x128xf32> to vector<1x128xf32>
    %140 = vector.shape_cast %139 : vector<1x128xf32> to vector<1x1x128xf32>
    %141 = vector.shape_cast %80 : vector<16x128xf32> to vector<1x16x128xf32>
    %142 = vector.broadcast %140 : vector<1x1x128xf32> to vector<1x16x128xf32>
    %143 = arith.mulf %142, %141 : vector<1x16x128xf32>
    %144 = math.exp %143 : vector<1x16x128xf32>
    %145 = vector.extract_strided_slice %84 {offsets = [0, 2, 0], sizes = [1, 1, 128], strides = [1, 1, 1]} : vector<1x8x128xf32> to vector<1x1x128xf32>
    %146 = vector.shape_cast %145 : vector<1x1x128xf32> to vector<1x128xf32>
    %147 = arith.mulf %139, %146 : vector<1x128xf32>
    %148 = vector.shape_cast %147 : vector<1x128xf32> to vector<1x1x128xf32>
    %149 = vector.extract_strided_slice %85 {offsets = [0, 2, 0], sizes = [1, 1, 16], strides = [1, 1, 1]} : vector<1x8x16xf32> to vector<1x1x16xf32>
    %150 = vector.shape_cast %149 : vector<1x1x16xf32> to vector<1x16xf32>
    %151 = vector.shape_cast %150 : vector<1x16xf32> to vector<1x16x1xf32>
    %152 = vector.broadcast %148 : vector<1x1x128xf32> to vector<1x16x128xf32>
    %153 = vector.broadcast %151 : vector<1x16x1xf32> to vector<1x16x128xf32>
    %154 = arith.mulf %152, %153 : vector<1x16x128xf32>
    %155 = arith.mulf %144, %131 : vector<1x16x128xf32>
    %156 = arith.addf %155, %154 : vector<1x16x128xf32>
    %157 = vector.extract_strided_slice %86 {offsets = [0, 2, 0], sizes = [1, 1, 16], strides = [1, 1, 1]} : vector<1x8x16xf32> to vector<1x1x16xf32>
    %158 = vector.shape_cast %157 : vector<1x1x16xf32> to vector<1x16xf32>
    %159 = vector.shape_cast %158 : vector<1x16xf32> to vector<1x16x1xf32>
    %160 = vector.broadcast %159 : vector<1x16x1xf32> to vector<1x16x128xf32>
    %161 = arith.mulf %160, %156 : vector<1x16x128xf32>
    %cst_65 = arith.constant dense<0.000000e+00> : vector<1x128xf32>
    %162 = vector.multi_reduction <add>, %161, %cst_65 [1] : vector<1x16x128xf32> to vector<1x128xf32>
    %163 = vector.extract_strided_slice %83 {offsets = [0, 3, 0], sizes = [1, 1, 128], strides = [1, 1, 1]} : vector<1x8x128xf32> to vector<1x1x128xf32>
    %164 = vector.shape_cast %163 : vector<1x1x128xf32> to vector<1x128xf32>
    %165 = vector.shape_cast %164 : vector<1x128xf32> to vector<1x1x128xf32>
    %166 = vector.shape_cast %80 : vector<16x128xf32> to vector<1x16x128xf32>
    %167 = vector.broadcast %165 : vector<1x1x128xf32> to vector<1x16x128xf32>
    %168 = arith.mulf %167, %166 : vector<1x16x128xf32>
    %169 = math.exp %168 : vector<1x16x128xf32>
    %170 = vector.extract_strided_slice %84 {offsets = [0, 3, 0], sizes = [1, 1, 128], strides = [1, 1, 1]} : vector<1x8x128xf32> to vector<1x1x128xf32>
    %171 = vector.shape_cast %170 : vector<1x1x128xf32> to vector<1x128xf32>
    %172 = arith.mulf %164, %171 : vector<1x128xf32>
    %173 = vector.shape_cast %172 : vector<1x128xf32> to vector<1x1x128xf32>
    %174 = vector.extract_strided_slice %85 {offsets = [0, 3, 0], sizes = [1, 1, 16], strides = [1, 1, 1]} : vector<1x8x16xf32> to vector<1x1x16xf32>
    %175 = vector.shape_cast %174 : vector<1x1x16xf32> to vector<1x16xf32>
    %176 = vector.shape_cast %175 : vector<1x16xf32> to vector<1x16x1xf32>
    %177 = vector.broadcast %173 : vector<1x1x128xf32> to vector<1x16x128xf32>
    %178 = vector.broadcast %176 : vector<1x16x1xf32> to vector<1x16x128xf32>
    %179 = arith.mulf %177, %178 : vector<1x16x128xf32>
    %180 = arith.mulf %169, %156 : vector<1x16x128xf32>
    %181 = arith.addf %180, %179 : vector<1x16x128xf32>
    %182 = vector.extract_strided_slice %86 {offsets = [0, 3, 0], sizes = [1, 1, 16], strides = [1, 1, 1]} : vector<1x8x16xf32> to vector<1x1x16xf32>
    %183 = vector.shape_cast %182 : vector<1x1x16xf32> to vector<1x16xf32>
    %184 = vector.shape_cast %183 : vector<1x16xf32> to vector<1x16x1xf32>
    %185 = vector.broadcast %184 : vector<1x16x1xf32> to vector<1x16x128xf32>
    %186 = arith.mulf %185, %181 : vector<1x16x128xf32>
    %cst_66 = arith.constant dense<0.000000e+00> : vector<1x128xf32>
    %187 = vector.multi_reduction <add>, %186, %cst_66 [1] : vector<1x16x128xf32> to vector<1x128xf32>
    %188 = vector.extract_strided_slice %83 {offsets = [0, 4, 0], sizes = [1, 1, 128], strides = [1, 1, 1]} : vector<1x8x128xf32> to vector<1x1x128xf32>
    %189 = vector.shape_cast %188 : vector<1x1x128xf32> to vector<1x128xf32>
    %190 = vector.shape_cast %189 : vector<1x128xf32> to vector<1x1x128xf32>
    %191 = vector.shape_cast %80 : vector<16x128xf32> to vector<1x16x128xf32>
    %192 = vector.broadcast %190 : vector<1x1x128xf32> to vector<1x16x128xf32>
    %193 = arith.mulf %192, %191 : vector<1x16x128xf32>
    %194 = math.exp %193 : vector<1x16x128xf32>
    %195 = vector.extract_strided_slice %84 {offsets = [0, 4, 0], sizes = [1, 1, 128], strides = [1, 1, 1]} : vector<1x8x128xf32> to vector<1x1x128xf32>
    %196 = vector.shape_cast %195 : vector<1x1x128xf32> to vector<1x128xf32>
    %197 = arith.mulf %189, %196 : vector<1x128xf32>
    %198 = vector.shape_cast %197 : vector<1x128xf32> to vector<1x1x128xf32>
    %199 = vector.extract_strided_slice %85 {offsets = [0, 4, 0], sizes = [1, 1, 16], strides = [1, 1, 1]} : vector<1x8x16xf32> to vector<1x1x16xf32>
    %200 = vector.shape_cast %199 : vector<1x1x16xf32> to vector<1x16xf32>
    %201 = vector.shape_cast %200 : vector<1x16xf32> to vector<1x16x1xf32>
    %202 = vector.broadcast %198 : vector<1x1x128xf32> to vector<1x16x128xf32>
    %203 = vector.broadcast %201 : vector<1x16x1xf32> to vector<1x16x128xf32>
    %204 = arith.mulf %202, %203 : vector<1x16x128xf32>
    %205 = arith.mulf %194, %181 : vector<1x16x128xf32>
    %206 = arith.addf %205, %204 : vector<1x16x128xf32>
    %207 = vector.extract_strided_slice %86 {offsets = [0, 4, 0], sizes = [1, 1, 16], strides = [1, 1, 1]} : vector<1x8x16xf32> to vector<1x1x16xf32>
    %208 = vector.shape_cast %207 : vector<1x1x16xf32> to vector<1x16xf32>
    %209 = vector.shape_cast %208 : vector<1x16xf32> to vector<1x16x1xf32>
    %210 = vector.broadcast %209 : vector<1x16x1xf32> to vector<1x16x128xf32>
    %211 = arith.mulf %210, %206 : vector<1x16x128xf32>
    %cst_67 = arith.constant dense<0.000000e+00> : vector<1x128xf32>
    %212 = vector.multi_reduction <add>, %211, %cst_67 [1] : vector<1x16x128xf32> to vector<1x128xf32>
    %213 = vector.extract_strided_slice %83 {offsets = [0, 5, 0], sizes = [1, 1, 128], strides = [1, 1, 1]} : vector<1x8x128xf32> to vector<1x1x128xf32>
    %214 = vector.shape_cast %213 : vector<1x1x128xf32> to vector<1x128xf32>
    %215 = vector.shape_cast %214 : vector<1x128xf32> to vector<1x1x128xf32>
    %216 = vector.shape_cast %80 : vector<16x128xf32> to vector<1x16x128xf32>
    %217 = vector.broadcast %215 : vector<1x1x128xf32> to vector<1x16x128xf32>
    %218 = arith.mulf %217, %216 : vector<1x16x128xf32>
    %219 = math.exp %218 : vector<1x16x128xf32>
    %220 = vector.extract_strided_slice %84 {offsets = [0, 5, 0], sizes = [1, 1, 128], strides = [1, 1, 1]} : vector<1x8x128xf32> to vector<1x1x128xf32>
    %221 = vector.shape_cast %220 : vector<1x1x128xf32> to vector<1x128xf32>
    %222 = arith.mulf %214, %221 : vector<1x128xf32>
    %223 = vector.shape_cast %222 : vector<1x128xf32> to vector<1x1x128xf32>
    %224 = vector.extract_strided_slice %85 {offsets = [0, 5, 0], sizes = [1, 1, 16], strides = [1, 1, 1]} : vector<1x8x16xf32> to vector<1x1x16xf32>
    %225 = vector.shape_cast %224 : vector<1x1x16xf32> to vector<1x16xf32>
    %226 = vector.shape_cast %225 : vector<1x16xf32> to vector<1x16x1xf32>
    %227 = vector.broadcast %223 : vector<1x1x128xf32> to vector<1x16x128xf32>
    %228 = vector.broadcast %226 : vector<1x16x1xf32> to vector<1x16x128xf32>
    %229 = arith.mulf %227, %228 : vector<1x16x128xf32>
    %230 = arith.mulf %219, %206 : vector<1x16x128xf32>
    %231 = arith.addf %230, %229 : vector<1x16x128xf32>
    %232 = vector.extract_strided_slice %86 {offsets = [0, 5, 0], sizes = [1, 1, 16], strides = [1, 1, 1]} : vector<1x8x16xf32> to vector<1x1x16xf32>
    %233 = vector.shape_cast %232 : vector<1x1x16xf32> to vector<1x16xf32>
    %234 = vector.shape_cast %233 : vector<1x16xf32> to vector<1x16x1xf32>
    %235 = vector.broadcast %234 : vector<1x16x1xf32> to vector<1x16x128xf32>
    %236 = arith.mulf %235, %231 : vector<1x16x128xf32>
    %cst_68 = arith.constant dense<0.000000e+00> : vector<1x128xf32>
    %237 = vector.multi_reduction <add>, %236, %cst_68 [1] : vector<1x16x128xf32> to vector<1x128xf32>
    %238 = vector.extract_strided_slice %83 {offsets = [0, 6, 0], sizes = [1, 1, 128], strides = [1, 1, 1]} : vector<1x8x128xf32> to vector<1x1x128xf32>
    %239 = vector.shape_cast %238 : vector<1x1x128xf32> to vector<1x128xf32>
    %240 = vector.shape_cast %239 : vector<1x128xf32> to vector<1x1x128xf32>
    %241 = vector.shape_cast %80 : vector<16x128xf32> to vector<1x16x128xf32>
    %242 = vector.broadcast %240 : vector<1x1x128xf32> to vector<1x16x128xf32>
    %243 = arith.mulf %242, %241 : vector<1x16x128xf32>
    %244 = math.exp %243 : vector<1x16x128xf32>
    %245 = vector.extract_strided_slice %84 {offsets = [0, 6, 0], sizes = [1, 1, 128], strides = [1, 1, 1]} : vector<1x8x128xf32> to vector<1x1x128xf32>
    %246 = vector.shape_cast %245 : vector<1x1x128xf32> to vector<1x128xf32>
    %247 = arith.mulf %239, %246 : vector<1x128xf32>
    %248 = vector.shape_cast %247 : vector<1x128xf32> to vector<1x1x128xf32>
    %249 = vector.extract_strided_slice %85 {offsets = [0, 6, 0], sizes = [1, 1, 16], strides = [1, 1, 1]} : vector<1x8x16xf32> to vector<1x1x16xf32>
    %250 = vector.shape_cast %249 : vector<1x1x16xf32> to vector<1x16xf32>
    %251 = vector.shape_cast %250 : vector<1x16xf32> to vector<1x16x1xf32>
    %252 = vector.broadcast %248 : vector<1x1x128xf32> to vector<1x16x128xf32>
    %253 = vector.broadcast %251 : vector<1x16x1xf32> to vector<1x16x128xf32>
    %254 = arith.mulf %252, %253 : vector<1x16x128xf32>
    %255 = arith.mulf %244, %231 : vector<1x16x128xf32>
    %256 = arith.addf %255, %254 : vector<1x16x128xf32>
    %257 = vector.extract_strided_slice %86 {offsets = [0, 6, 0], sizes = [1, 1, 16], strides = [1, 1, 1]} : vector<1x8x16xf32> to vector<1x1x16xf32>
    %258 = vector.shape_cast %257 : vector<1x1x16xf32> to vector<1x16xf32>
    %259 = vector.shape_cast %258 : vector<1x16xf32> to vector<1x16x1xf32>
    %260 = vector.broadcast %259 : vector<1x16x1xf32> to vector<1x16x128xf32>
    %261 = arith.mulf %260, %256 : vector<1x16x128xf32>
    %cst_69 = arith.constant dense<0.000000e+00> : vector<1x128xf32>
    %262 = vector.multi_reduction <add>, %261, %cst_69 [1] : vector<1x16x128xf32> to vector<1x128xf32>
    %263 = vector.extract_strided_slice %83 {offsets = [0, 7, 0], sizes = [1, 1, 128], strides = [1, 1, 1]} : vector<1x8x128xf32> to vector<1x1x128xf32>
    %264 = vector.shape_cast %263 : vector<1x1x128xf32> to vector<1x128xf32>
    %265 = vector.shape_cast %264 : vector<1x128xf32> to vector<1x1x128xf32>
    %266 = vector.shape_cast %80 : vector<16x128xf32> to vector<1x16x128xf32>
    %267 = vector.broadcast %265 : vector<1x1x128xf32> to vector<1x16x128xf32>
    %268 = arith.mulf %267, %266 : vector<1x16x128xf32>
    %269 = math.exp %268 : vector<1x16x128xf32>
    %270 = vector.extract_strided_slice %84 {offsets = [0, 7, 0], sizes = [1, 1, 128], strides = [1, 1, 1]} : vector<1x8x128xf32> to vector<1x1x128xf32>
    %271 = vector.shape_cast %270 : vector<1x1x128xf32> to vector<1x128xf32>
    %272 = arith.mulf %264, %271 : vector<1x128xf32>
    %273 = vector.shape_cast %272 : vector<1x128xf32> to vector<1x1x128xf32>
    %274 = vector.extract_strided_slice %85 {offsets = [0, 7, 0], sizes = [1, 1, 16], strides = [1, 1, 1]} : vector<1x8x16xf32> to vector<1x1x16xf32>
    %275 = vector.shape_cast %274 : vector<1x1x16xf32> to vector<1x16xf32>
    %276 = vector.shape_cast %275 : vector<1x16xf32> to vector<1x16x1xf32>
    %277 = vector.broadcast %273 : vector<1x1x128xf32> to vector<1x16x128xf32>
    %278 = vector.broadcast %276 : vector<1x16x1xf32> to vector<1x16x128xf32>
    %279 = arith.mulf %277, %278 : vector<1x16x128xf32>
    %280 = arith.mulf %269, %256 : vector<1x16x128xf32>
    %281 = arith.addf %280, %279 : vector<1x16x128xf32>
    %282 = vector.extract_strided_slice %86 {offsets = [0, 7, 0], sizes = [1, 1, 16], strides = [1, 1, 1]} : vector<1x8x16xf32> to vector<1x1x16xf32>
    %283 = vector.shape_cast %282 : vector<1x1x16xf32> to vector<1x16xf32>
    %284 = vector.shape_cast %283 : vector<1x16xf32> to vector<1x16x1xf32>
    %285 = vector.broadcast %284 : vector<1x16x1xf32> to vector<1x16x128xf32>
    %286 = arith.mulf %285, %281 : vector<1x16x128xf32>
    %cst_70 = arith.constant dense<0.000000e+00> : vector<1x128xf32>
    %287 = vector.multi_reduction <add>, %286, %cst_70 [1] : vector<1x16x128xf32> to vector<1x128xf32>
    %288 = vector.shape_cast %112 : vector<1x128xf32> to vector<1x1x128xf32>
    %289 = vector.shape_cast %137 : vector<1x128xf32> to vector<1x1x128xf32>
    %290 = vector.shape_cast %162 : vector<1x128xf32> to vector<1x1x128xf32>
    %291 = vector.shape_cast %187 : vector<1x128xf32> to vector<1x1x128xf32>
    %292 = vector.shape_cast %212 : vector<1x128xf32> to vector<1x1x128xf32>
    %293 = vector.shape_cast %237 : vector<1x128xf32> to vector<1x1x128xf32>
    %294 = vector.shape_cast %262 : vector<1x128xf32> to vector<1x1x128xf32>
    %295 = vector.shape_cast %287 : vector<1x128xf32> to vector<1x1x128xf32>
    %296 = tpu.concatenate %288, %289, %290, %291, %292, %293, %294, %295 in 1 : vector<1x1x128xf32>, vector<1x1x128xf32>, vector<1x1x128xf32>, vector<1x1x128xf32>, vector<1x1x128xf32>, vector<1x1x128xf32>, vector<1x1x128xf32>, vector<1x1x128xf32> -> vector<1x8x128xf32>
    %297 = vector.shape_cast %296 : vector<1x8x128xf32> to vector<8x128xf32>
    %298 = vector.broadcast %82 : vector<1x128xf32> to vector<8x128xf32>
    %299 = arith.mulf %298, %50 : vector<8x128xf32>
    %300 = arith.addf %297, %299 : vector<8x128xf32>
    %cst_71 = arith.constant 0.000000e+00 : f32
    %301 = vector.broadcast %cst_71 : f32 to vector<8x128xf32>
    %302 = arith.subf %301, %13 : vector<8x128xf32>
    %303 = math.exp %302 : vector<8x128xf32>
    %cst_72 = arith.constant 1.000000e+00 : f32
    %304 = vector.broadcast %cst_72 : f32 to vector<8x128xf32>
    %305 = arith.addf %304, %303 : vector<8x128xf32>
    %cst_73 = arith.constant 1.000000e+00 : f32
    %306 = vector.broadcast %cst_73 : f32 to vector<8x128xf32>
    %307 = arith.divf %306, %305 : vector<8x128xf32>
    %308 = arith.mulf %13, %307 : vector<8x128xf32>
    %309 = arith.mulf %300, %308 : vector<8x128xf32>
    %310 = arith.addf %309, %5 : vector<8x128xf32>
    %311 = arith.truncf %310 : vector<8x128xf32> to vector<8x128xbf16>
    %cst_74 = arith.constant dense<0.000000e+00> : vector<8x128xf32>
    %312 = tpu.matmul %311, %7, %cst_74 {dimension_numbers = #tpu.dot_dimension_numbers<[1], [0], [0], [1], [0, 0, 1, 1], [], []>} : vector<8x128xbf16>, vector<128x128xbf16>, vector<8x128xf32> -> vector<8x128xf32>
    %313 = vector.broadcast %9 : vector<1x128xf32> to vector<8x128xf32>
    %314 = arith.addf %312, %313 : vector<8x128xf32>
    %c0_75 = arith.constant 0 : index
    %c0_76 = arith.constant 0 : index
    %315 = vector.load %arg19[%c0_75, %c0_76] : memref<8x128xf32, #tpu.memory_space<vmem>>, vector<8x128xf32>
    tpu.vector_store %arg19[%c0_75, %c0_76], %314 {strides = array<i32>} : memref<8x128xf32, #tpu.memory_space<vmem>>, vector<8x128xf32>,
    %c1_i32_77 = arith.constant 1 : i32
    %316 = arith.cmpi eq, %arg1, %c1_i32_77 : i32
    %317 = arith.extui %316 : i1 to i32
    %c0_i32_78 = arith.constant 0 : i32
    %318 = arith.cmpi ne, %317, %c0_i32_78 : i32
    scf.if %318 {
      %cst_79 = arith.constant dense<0.000000e+00> : vector<8xf32>
      %319 = vector.multi_reduction <add>, %314, %cst_79 [1] : vector<8x128xf32> to vector<8xf32>
      %320 = vector.shape_cast %319 : vector<8xf32> to vector<8x1xf32>
      %cst_80 = arith.constant 1.280000e+02 : f32
      %321 = vector.broadcast %cst_80 : f32 to vector<8x1xf32>
      %322 = arith.divf %320, %321 : vector<8x1xf32>
      %323 = vector.broadcast %322 : vector<8x1xf32> to vector<8x128xf32>
      %324 = arith.subf %314, %323 : vector<8x128xf32>
      %325 = vector.broadcast %322 : vector<8x1xf32> to vector<8x128xf32>
      %326 = arith.subf %314, %325 : vector<8x128xf32>
      %327 = arith.mulf %324, %326 : vector<8x128xf32>
      %cst_81 = arith.constant dense<0.000000e+00> : vector<8xf32>
      %328 = vector.multi_reduction <add>, %327, %cst_81 [1] : vector<8x128xf32> to vector<8xf32>
      %329 = vector.shape_cast %328 : vector<8xf32> to vector<8x1xf32>
      %cst_82 = arith.constant 1.280000e+02 : f32
      %330 = vector.broadcast %cst_82 : f32 to vector<8x1xf32>
      %331 = arith.divf %329, %330 : vector<8x1xf32>
      %332 = vector.broadcast %322 : vector<8x1xf32> to vector<8x128xf32>
      %333 = arith.subf %314, %332 : vector<8x128xf32>
      %cst_83 = arith.constant 9.99999974E-6 : f32
      %334 = vector.broadcast %cst_83 : f32 to vector<8x1xf32>
      %335 = arith.addf %331, %334 : vector<8x1xf32>
      %336 = math.rsqrt %335 : vector<8x1xf32>
      %337 = vector.broadcast %336 : vector<8x1xf32> to vector<8x128xf32>
      %338 = arith.mulf %333, %337 : vector<8x128xf32>
      %339 = vector.broadcast %0 : vector<1x128xf32> to vector<8x128xf32>
      %340 = arith.mulf %338, %339 : vector<8x128xf32>
      %341 = vector.broadcast %1 : vector<1x128xf32> to vector<8x128xf32>
      %342 = arith.addf %340, %341 : vector<8x128xf32>
      %c0_84 = arith.constant 0 : index
      %c0_85 = arith.constant 0 : index
      %343 = vector.load %arg18[%c0_84, %c0_85] : memref<8x128xf32, #tpu.memory_space<vmem>>, vector<8x128xf32>
      tpu.vector_store %arg18[%c0_84, %c0_85], %342 {strides = array<i32>} : memref<8x128xf32, #tpu.memory_space<vmem>>, vector<8x128xf32>,
    } else {
    }
    return
  }
  func.func @transform_0(%arg0: i32, %arg1: i32) -> (i32, i32) {
    %c0_i32 = arith.constant 0 : i32
    %c0_i32_0 = arith.constant 0 : i32
    return %arg0, %c0_i32 : i32, i32
  }
  func.func @transform_1(%arg0: i32, %arg1: i32) -> (i32, i32) {
    %c0_i32 = arith.constant 0 : i32
    %c0_i32_0 = arith.constant 0 : i32
    %c0_i32_1 = arith.constant 0 : i32
    return %c0_i32, %c0_i32_0 : i32, i32
  }
  func.func @transform_2(%arg0: i32, %arg1: i32) -> (i32, i32) {
    %c0_i32 = arith.constant 0 : i32
    %c0_i32_0 = arith.constant 0 : i32
    %c0_i32_1 = arith.constant 0 : i32
    return %c0_i32, %c0_i32_0 : i32, i32
  }
  func.func @transform_3(%arg0: i32, %arg1: i32) -> (i32, i32, i32) {
    %c0_i32 = arith.constant 0 : i32
    %c0_i32_0 = arith.constant 0 : i32
    %c0_i32_1 = arith.constant 0 : i32
    return %arg1, %c0_i32, %c0_i32_0 : i32, i32, i32
  }
  func.func @transform_4(%arg0: i32, %arg1: i32) -> (i32, i32, i32) {
    %c0_i32 = arith.constant 0 : i32
    %c0_i32_0 = arith.constant 0 : i32
    %c0_i32_1 = arith.constant 0 : i32
    return %arg1, %c0_i32, %c0_i32_0 : i32, i32, i32
  }
  func.func @transform_5(%arg0: i32, %arg1: i32) -> (i32, i32, i32) {
    %c0_i32 = arith.constant 0 : i32
    %c0_i32_0 = arith.constant 0 : i32
    %c0_i32_1 = arith.constant 0 : i32
    return %arg1, %c0_i32, %c0_i32_0 : i32, i32, i32
  }
  func.func @transform_6(%arg0: i32, %arg1: i32) -> (i32, i32, i32) {
    %c0_i32 = arith.constant 0 : i32
    %c0_i32_0 = arith.constant 0 : i32
    %c0_i32_1 = arith.constant 0 : i32
    return %arg1, %c0_i32, %c0_i32_0 : i32, i32, i32
  }
  func.func @transform_7(%arg0: i32, %arg1: i32) -> (i32, i32, i32) {
    %c0_i32 = arith.constant 0 : i32
    %c0_i32_0 = arith.constant 0 : i32
    %c0_i32_1 = arith.constant 0 : i32
    return %arg1, %c0_i32, %c0_i32_0 : i32, i32, i32
  }
  func.func @transform_8(%arg0: i32, %arg1: i32) -> (i32, i32, i32) {
    %c0_i32 = arith.constant 0 : i32
    %c0_i32_0 = arith.constant 0 : i32
    %c0_i32_1 = arith.constant 0 : i32
    return %arg1, %c0_i32, %c0_i32_0 : i32, i32, i32
  }
  func.func @transform_9(%arg0: i32, %arg1: i32) -> (i32, i32, i32) {
    %c0_i32 = arith.constant 0 : i32
    %c0_i32_0 = arith.constant 0 : i32
    %c0_i32_1 = arith.constant 0 : i32
    return %arg1, %c0_i32, %c0_i32_0 : i32, i32, i32
  }
  func.func @transform_10(%arg0: i32, %arg1: i32) -> (i32, i32, i32) {
    %c0_i32 = arith.constant 0 : i32
    %c0_i32_0 = arith.constant 0 : i32
    %c0_i32_1 = arith.constant 0 : i32
    return %arg1, %c0_i32, %c0_i32_0 : i32, i32, i32
  }
  func.func @transform_11(%arg0: i32, %arg1: i32) -> (i32, i32, i32) {
    %c0_i32 = arith.constant 0 : i32
    %c0_i32_0 = arith.constant 0 : i32
    %c0_i32_1 = arith.constant 0 : i32
    return %arg1, %c0_i32, %c0_i32_0 : i32, i32, i32
  }
  func.func @transform_12(%arg0: i32, %arg1: i32) -> (i32, i32, i32) {
    %c0_i32 = arith.constant 0 : i32
    %c0_i32_0 = arith.constant 0 : i32
    %c0_i32_1 = arith.constant 0 : i32
    return %arg1, %c0_i32, %c0_i32_0 : i32, i32, i32
  }
  func.func @transform_13(%arg0: i32, %arg1: i32) -> (i32, i32, i32) {
    %c0_i32 = arith.constant 0 : i32
    %c0_i32_0 = arith.constant 0 : i32
    %c0_i32_1 = arith.constant 0 : i32
    return %arg1, %c0_i32, %c0_i32_0 : i32, i32, i32
  }
  func.func @transform_14(%arg0: i32, %arg1: i32) -> (i32, i32, i32) {
    %c0_i32 = arith.constant 0 : i32
    %c0_i32_0 = arith.constant 0 : i32
    %c0_i32_1 = arith.constant 0 : i32
    return %arg1, %c0_i32, %c0_i32_0 : i32, i32, i32
  }
  func.func @transform_15(%arg0: i32, %arg1: i32) -> (i32, i32, i32) {
    %c0_i32 = arith.constant 0 : i32
    %c0_i32_0 = arith.constant 0 : i32
    %c0_i32_1 = arith.constant 0 : i32
    return %arg1, %c0_i32, %c0_i32_0 : i32, i32, i32
  }
  func.func @transform_16(%arg0: i32, %arg1: i32) -> (i32, i32) {
    %c0_i32 = arith.constant 0 : i32
    %c0_i32_0 = arith.constant 0 : i32
    return %arg0, %c0_i32 : i32, i32
  }
}

</mosaic_0001>

<llo_original>
// kernel: cobra_forward.1
$region0: #{cobra_forward.1}
  #allocation0 [shape = 'u32[]', space=smem, size = 0x4, offset = 0x4, fixed_abs, tag = 'smem constant byte address 0x4 - core index']
  #allocation1 [shape = 'u32[144,128]{1,0:T(1,128)}', space=vmem, size = 0x12000, scoped, tag = 'internal scratch']
  #allocation2 [shape = 'f32[8,128]{1,0:T(8,128)}', space=vmem, size = 0x1000, scoped, tag = 'scratch operand']
  %s0 = inlined_call_operand.vmem [shape: f32[16,128], index: 0, kind: input, shape index: {}]
  %s1 = inlined_call_operand.vmem [shape: f32[1,128], index: 1, kind: input, shape index: {}]
  %s2 = inlined_call_operand.vmem [shape: f32[1,128], index: 2, kind: input, shape index: {}]
  %s3 = inlined_call_operand.vmem [shape: bf16[2,128,128], index: 3, kind: input, shape index: {}]
  %s4 = inlined_call_operand.vmem [shape: f32[2,1,128], index: 4, kind: input, shape index: {}]
  %s5 = inlined_call_operand.vmem [shape: bf16[2,8,8], index: 5, kind: input, shape index: {}]
  %s6 = inlined_call_operand.vmem [shape: bf16[2,8,8], index: 6, kind: input, shape index: {}]
  %s7 = inlined_call_operand.vmem [shape: bf16[2,8,8], index: 7, kind: input, shape index: {}]
  %s8 = inlined_call_operand.vmem [shape: f32[2,8,1], index: 8, kind: input, shape index: {}]
  %s9 = inlined_call_operand.vmem [shape: bf16[2,128,8], index: 9, kind: input, shape index: {}]
  %s10 = inlined_call_operand.vmem [shape: bf16[2,128,16], index: 10, kind: input, shape index: {}]
  %s11 = inlined_call_operand.vmem [shape: bf16[2,128,16], index: 11, kind: input, shape index: {}]
  %s12 = inlined_call_operand.vmem [shape: bf16[2,8,128], index: 12, kind: input, shape index: {}]
  %s13 = inlined_call_operand.vmem [shape: f32[2,1,128], index: 13, kind: input, shape index: {}]
  %s14 = inlined_call_operand.vmem [shape: f32[2,16,128], index: 14, kind: input, shape index: {}]
  %s15 = inlined_call_operand.vmem [shape: f32[2,1,128], index: 15, kind: input, shape index: {}]
  %s16 = inlined_call_operand.hbm [shape: f32[16,128], index: 16, kind: output, shape index: {}]
  %s17 = sld [smem:[#allocation0]]
  $region105: #{cobra_forward.1} parent=0
    _
  %s19 = ssub.s32 1, %s17
  %s20 = scalar_select 0, %s19, %s17
  $region1: #{cobra_forward.1} parent=0
    #allocation3 [shape = 'u8[8192]{0}', space=vmem, size = 0x2000, scoped, tag = 'output window, operand 0']
    #allocation4 [shape = 's32[2]{0}', space=sflag, size = 0x8, scoped, tag = 'scoped memory for cobra_forward.1']
    %21 = vsyncpa [#allocation4], 0
    %s22 = scalar_lea.sflag [#allocation4], 1
    %23 = vsyncpa %s22, 0
    loop: start=0, step=1, limit=6
    $region2: #{cobra_forward.1} parent=1 // loop_pre_header
      _
    $region3: #{cobra_forward.1} parent=1 // loop_header
      %s25 = sphi 0, %s29
      %p26 = scmp.ge.s32.totalorder %s25, 6
      %s32 = sphi 0, %s44
      %s33 = sphi 0, %s40
      %s34 = sphi 0, %s32
      %s35 = sphi 0, %s33
      %s36 = sphi 0, %s34
      %s37 = sphi 0, %s35
      %s47 = sphi 0, %s49
      %s50 = sphi 0, %s47
      %s51 = sphi 0, %s50
      %s67 = sphi 0, %s51
      %s71 = sphi 0, %s71
      %s73 = sphi 0, %s71
      %s74 = sphi 0, %s73
      %s88 = sphi 0, %s74
      %s92 = sphi 0, %s92
      %s94 = sphi 0, %s92
      %s95 = sphi 0, %s94
      %s109 = sphi 0, %s95
      %s115 = sphi 0, %s117
      %s118 = sphi 0, %s115
      %s119 = sphi 0, %s118
      %s135 = sphi 0, %s119
      %s141 = sphi 0, %s143
      %s144 = sphi 0, %s141
      %s145 = sphi 0, %s144
      %s161 = sphi 0, %s145
      %s167 = sphi 0, %s169
      %s170 = sphi 0, %s167
      %s171 = sphi 0, %s170
      %s187 = sphi 0, %s171
      %s193 = sphi 0, %s195
      %s196 = sphi 0, %s193
      %s197 = sphi 0, %s196
      %s213 = sphi 0, %s197
      %s219 = sphi 0, %s221
      %s222 = sphi 0, %s219
      %s223 = sphi 0, %s222
      %s239 = sphi 0, %s223
      %s245 = sphi 0, %s247
      %s248 = sphi 0, %s245
      %s249 = sphi 0, %s248
      %s265 = sphi 0, %s249
      %s271 = sphi 0, %s273
      %s274 = sphi 0, %s271
      %s275 = sphi 0, %s274
      %s291 = sphi 0, %s275
      %s297 = sphi 0, %s299
      %s300 = sphi 0, %s297
      %s301 = sphi 0, %s300
      %s317 = sphi 0, %s301
      %s323 = sphi 0, %s325
      %s326 = sphi 0, %s323
      %s327 = sphi 0, %s326
      %s343 = sphi 0, %s327
      %s349 = sphi 0, %s351
      %s352 = sphi 0, %s349
      %s353 = sphi 0, %s352
      %s369 = sphi 0, %s353
      %s375 = sphi 0, %s377
      %s378 = sphi 0, %s375
      %s379 = sphi 0, %s378
      %s395 = sphi 0, %s379
      %s401 = sphi 0, %s403
      %s404 = sphi 0, %s401
      %s405 = sphi 0, %s404
      %s421 = sphi 0, %s405
      %s427 = sphi 0, %s429
      %s430 = sphi 0, %s427
      %s431 = sphi 0, %s430
      %s447 = sphi 0, %s431
      %s453 = sphi 0, %s455
      %s456 = sphi 0, %s453
      %s457 = sphi 0, %s456
      %s473 = sphi 0, %s457
    $region4: #{cobra_forward.1} parent=1 // loop_header_branch
      %28 = sbr.rel (%p26) target = $region8
    $region5: #{cobra_forward.1} parent=1 // loop_body
      %s30 = ssub.s32 %s25, 1
      %s31 = ssub.s32 %s25, 2
      %s38 = sadd.s32 1, %s33
      %p39 = scmp.ge.s32.totalorder %s38, 2
      %s40 = scalar_select %p39, 0, %s38
      %s41 = sadd.s32 1, %s32
      %s42 = scalar_select %p39, %s41, %s32
      %p43 = scmp.ge.s32.totalorder %s42, 2
      %s44 = scalar_select %p43, 0, %s42
      %s45 = ssub.s32 %s32, %s44
      %p46 = scmp.eq.s32.totalorder %s45, 0
      %s48 = sadd.s32 %s47, 1
      %s49 = scalar_select %p46, %s47, %s48
      %p52 = pneg %p46
      %p53 = scmp.eq.s32.totalorder %s25, 3
      %p54 = por %p52, %p53
      %p55 = scmp.ne.s32.totalorder %s47, %s50
      %p56 = scmp.eq.s32.totalorder %s25, 0
      %p57 = por %p55, %p56
      %p58 = scmp.ne.s32.totalorder %s47, %s50
      %p59 = scmp.eq.s32.totalorder %s30, 3
      %p60 = por %p58, %p59
      %p61 = scmp.ne.s32.totalorder %s50, %s51
      %p62 = scmp.eq.s32.totalorder %s30, 0
      %p63 = por %p61, %p62
      %p64 = scmp.ne.s32.totalorder %s50, %s51
      %p65 = scmp.eq.s32.totalorder %s31, 3
      %p66 = por %p64, %p65
      %p68 = scmp.ne.s32.totalorder %s51, %s67
      %p69 = scmp.eq.s32.totalorder %s31, 0
      %p70 = por %p68, %p69
      %s72 = sadd.s32 %s71, 1
      %p75 = scmp.eq.s32.totalorder %s25, 3
      %p76 = scmp.ne.s32.totalorder %s71, %s73
      %p77 = scmp.eq.s32.totalorder %s25, 0
      %p78 = por %p76, %p77
      %p79 = scmp.ne.s32.totalorder %s71, %s73
      %p80 = scmp.eq.s32.totalorder %s30, 3
      %p81 = por %p79, %p80
      %p82 = scmp.ne.s32.totalorder %s73, %s74
      %p83 = scmp.eq.s32.totalorder %s30, 0
      %p84 = por %p82, %p83
      %p85 = scmp.ne.s32.totalorder %s73, %s74
      %p86 = scmp.eq.s32.totalorder %s31, 3
      %p87 = por %p85, %p86
      %p89 = scmp.ne.s32.totalorder %s74, %s88
      %p90 = scmp.eq.s32.totalorder %s31, 0
      %p91 = por %p89, %p90
      %s93 = sadd.s32 %s92, 1
      %p96 = scmp.eq.s32.totalorder %s25, 3
      %p97 = scmp.ne.s32.totalorder %s92, %s94
      %p98 = scmp.eq.s32.totalorder %s25, 0
      %p99 = por %p97, %p98
      %p100 = scmp.ne.s32.totalorder %s92, %s94
      %p101 = scmp.eq.s32.totalorder %s30, 3
      %p102 = por %p100, %p101
      %p103 = scmp.ne.s32.totalorder %s94, %s95
      %p104 = scmp.eq.s32.totalorder %s30, 0
      %p105 = por %p103, %p104
      %p106 = scmp.ne.s32.totalorder %s94, %s95
      %p107 = scmp.eq.s32.totalorder %s31, 3
      %p108 = por %p106, %p107
      %p110 = scmp.ne.s32.totalorder %s95, %s109
      %p111 = scmp.eq.s32.totalorder %s31, 0
      %p112 = por %p110, %p111
      %s113 = ssub.s32 %s33, %s40
      %p114 = scmp.eq.s32.totalorder %s113, 0
      %s116 = sadd.s32 %s115, 1
      %s117 = scalar_select %p114, %s115, %s116
      %p120 = pneg %p114
      %p121 = scmp.eq.s32.totalorder %s25, 3
      %p122 = por %p120, %p121
      %p123 = scmp.ne.s32.totalorder %s115, %s118
      %p124 = scmp.eq.s32.totalorder %s25, 0
      %p125 = por %p123, %p124
      %p126 = scmp.ne.s32.totalorder %s115, %s118
      %p127 = scmp.eq.s32.totalorder %s30, 3
      %p128 = por %p126, %p127
      %p129 = scmp.ne.s32.totalorder %s118, %s119
      %p130 = scmp.eq.s32.totalorder %s30, 0
      %p131 = por %p129, %p130
      %p132 = scmp.ne.s32.totalorder %s118, %s119
      %p133 = scmp.eq.s32.totalorder %s31, 3
      %p134 = por %p132, %p133
      %p136 = scmp.ne.s32.totalorder %s119, %s135
      %p137 = scmp.eq.s32.totalorder %s31, 0
      %p138 = por %p136, %p137
      %s139 = ssub.s32 %s33, %s40
      %p140 = scmp.eq.s32.totalorder %s139, 0
      %s142 = sadd.s32 %s141, 1
      %s143 = scalar_select %p140, %s141, %s142
      %p146 = pneg %p140
      %p147 = scmp.eq.s32.totalorder %s25, 3
      %p148 = por %p146, %p147
      %p149 = scmp.ne.s32.totalorder %s141, %s144
      %p150 = scmp.eq.s32.totalorder %s25, 0
      %p151 = por %p149, %p150
      %p152 = scmp.ne.s32.totalorder %s141, %s144
      %p153 = scmp.eq.s32.totalorder %s30, 3
      %p154 = por %p152, %p153
      %p155 = scmp.ne.s32.totalorder %s144, %s145
      %p156 = scmp.eq.s32.totalorder %s30, 0
      %p157 = por %p155, %p156
      %p158 = scmp.ne.s32.totalorder %s144, %s145
      %p159 = scmp.eq.s32.totalorder %s31, 3
      %p160 = por %p158, %p159
      %p162 = scmp.ne.s32.totalorder %s145, %s161
      %p163 = scmp.eq.s32.totalorder %s31, 0
      %p164 = por %p162, %p163
      %s165 = ssub.s32 %s33, %s40
      %p166 = scmp.eq.s32.totalorder %s165, 0
      %s168 = sadd.s32 %s167, 1
      %s169 = scalar_select %p166, %s167, %s168
      %p172 = pneg %p166
      %p173 = scmp.eq.s32.totalorder %s25, 3
      %p174 = por %p172, %p173
      %p175 = scmp.ne.s32.totalorder %s167, %s170
      %p176 = scmp.eq.s32.totalorder %s25, 0
      %p177 = por %p175, %p176
      %p178 = scmp.ne.s32.totalorder %s167, %s170
      %p179 = scmp.eq.s32.totalorder %s30, 3
      %p180 = por %p178, %p179
      %p181 = scmp.ne.s32.totalorder %s170, %s171
      %p182 = scmp.eq.s32.totalorder %s30, 0
      %p183 = por %p181, %p182
      %p184 = scmp.ne.s32.totalorder %s170, %s171
      %p185 = scmp.eq.s32.totalorder %s31, 3
      %p186 = por %p184, %p185
      %p188 = scmp.ne.s32.totalorder %s171, %s187
      %p189 = scmp.eq.s32.totalorder %s31, 0
      %p190 = por %p188, %p189
      %s191 = ssub.s32 %s33, %s40
      %p192 = scmp.eq.s32.totalorder %s191, 0
      %s194 = sadd.s32 %s193, 1
      %s195 = scalar_select %p192, %s193, %s194
      %p198 = pneg %p192
      %p199 = scmp.eq.s32.totalorder %s25, 3
      %p200 = por %p198, %p199
      %p201 = scmp.ne.s32.totalorder %s193, %s196
      %p202 = scmp.eq.s32.totalorder %s25, 0
      %p203 = por %p201, %p202
      %p204 = scmp.ne.s32.totalorder %s193, %s196
      %p205 = scmp.eq.s32.totalorder %s30, 3
      %p206 = por %p204, %p205
      %p207 = scmp.ne.s32.totalorder %s196, %s197
      %p208 = scmp.eq.s32.totalorder %s30, 0
      %p209 = por %p207, %p208
      %p210 = scmp.ne.s32.totalorder %s196, %s197
      %p211 = scmp.eq.s32.totalorder %s31, 3
      %p212 = por %p210, %p211
      %p214 = scmp.ne.s32.totalorder %s197, %s213
      %p215 = scmp.eq.s32.totalorder %s31, 0
      %p216 = por %p214, %p215
      %s217 = ssub.s32 %s33, %s40
      %p218 = scmp.eq.s32.totalorder %s217, 0
      %s220 = sadd.s32 %s219, 1
      %s221 = scalar_select %p218, %s219, %s220
      %p224 = pneg %p218
      %p225 = scmp.eq.s32.totalorder %s25, 3
      %p226 = por %p224, %p225
      %p227 = scmp.ne.s32.totalorder %s219, %s222
      %p228 = scmp.eq.s32.totalorder %s25, 0
      %p229 = por %p227, %p228
      %p230 = scmp.ne.s32.totalorder %s219, %s222
      %p231 = scmp.eq.s32.totalorder %s30, 3
      %p232 = por %p230, %p231
      %p233 = scmp.ne.s32.totalorder %s222, %s223
      %p234 = scmp.eq.s32.totalorder %s30, 0
      %p235 = por %p233, %p234
      %p236 = scmp.ne.s32.totalorder %s222, %s223
      %p237 = scmp.eq.s32.totalorder %s31, 3
      %p238 = por %p236, %p237
      %p240 = scmp.ne.s32.totalorder %s223, %s239
      %p241 = scmp.eq.s32.totalorder %s31, 0
      %p242 = por %p240, %p241
      %s243 = ssub.s32 %s33, %s40
      %p244 = scmp.eq.s32.totalorder %s243, 0
      %s246 = sadd.s32 %s245, 1
      %s247 = scalar_select %p244, %s245, %s246
      %p250 = pneg %p244
      %p251 = scmp.eq.s32.totalorder %s25, 3
      %p252 = por %p250, %p251
      %p253 = scmp.ne.s32.totalorder %s245, %s248
      %p254 = scmp.eq.s32.totalorder %s25, 0
      %p255 = por %p253, %p254
      %p256 = scmp.ne.s32.totalorder %s245, %s248
      %p257 = scmp.eq.s32.totalorder %s30, 3
      %p258 = por %p256, %p257
      %p259 = scmp.ne.s32.totalorder %s248, %s249
      %p260 = scmp.eq.s32.totalorder %s30, 0
      %p261 = por %p259, %p260
      %p262 = scmp.ne.s32.totalorder %s248, %s249
      %p263 = scmp.eq.s32.totalorder %s31, 3
      %p264 = por %p262, %p263
      %p266 = scmp.ne.s32.totalorder %s249, %s265
      %p267 = scmp.eq.s32.totalorder %s31, 0
      %p268 = por %p266, %p267
      %s269 = ssub.s32 %s33, %s40
      %p270 = scmp.eq.s32.totalorder %s269, 0
      %s272 = sadd.s32 %s271, 1
      %s273 = scalar_select %p270, %s271, %s272
      %p276 = pneg %p270
      %p277 = scmp.eq.s32.totalorder %s25, 3
      %p278 = por %p276, %p277
      %p279 = scmp.ne.s32.totalorder %s271, %s274
      %p280 = scmp.eq.s32.totalorder %s25, 0
      %p281 = por %p279, %p280
      %p282 = scmp.ne.s32.totalorder %s271, %s274
      %p283 = scmp.eq.s32.totalorder %s30, 3
      %p284 = por %p282, %p283
      %p285 = scmp.ne.s32.totalorder %s274, %s275
      %p286 = scmp.eq.s32.totalorder %s30, 0
      %p287 = por %p285, %p286
      %p288 = scmp.ne.s32.totalorder %s274, %s275
      %p289 = scmp.eq.s32.totalorder %s31, 3
      %p290 = por %p288, %p289
      %p292 = scmp.ne.s32.totalorder %s275, %s291
      %p293 = scmp.eq.s32.totalorder %s31, 0
      %p294 = por %p292, %p293
      %s295 = ssub.s32 %s33, %s40
      %p296 = scmp.eq.s32.totalorder %s295, 0
      %s298 = sadd.s32 %s297, 1
      %s299 = scalar_select %p296, %s297, %s298
      %p302 = pneg %p296
      %p303 = scmp.eq.s32.totalorder %s25, 3
      %p304 = por %p302, %p303
      %p305 = scmp.ne.s32.totalorder %s297, %s300
      %p306 = scmp.eq.s32.totalorder %s25, 0
      %p307 = por %p305, %p306
      %p308 = scmp.ne.s32.totalorder %s297, %s300
      %p309 = scmp.eq.s32.totalorder %s30, 3
      %p310 = por %p308, %p309
      %p311 = scmp.ne.s32.totalorder %s300, %s301
      %p312 = scmp.eq.s32.totalorder %s30, 0
      %p313 = por %p311, %p312
      %p314 = scmp.ne.s32.totalorder %s300, %s301
      %p315 = scmp.eq.s32.totalorder %s31, 3
      %p316 = por %p314, %p315
      %p318 = scmp.ne.s32.totalorder %s301, %s317
      %p319 = scmp.eq.s32.totalorder %s31, 0
      %p320 = por %p318, %p319
      %s321 = ssub.s32 %s33, %s40
      %p322 = scmp.eq.s32.totalorder %s321, 0
      %s324 = sadd.s32 %s323, 1
      %s325 = scalar_select %p322, %s323, %s324
      %p328 = pneg %p322
      %p329 = scmp.eq.s32.totalorder %s25, 3
      %p330 = por %p328, %p329
      %p331 = scmp.ne.s32.totalorder %s323, %s326
      %p332 = scmp.eq.s32.totalorder %s25, 0
      %p333 = por %p331, %p332
      %p334 = scmp.ne.s32.totalorder %s323, %s326
      %p335 = scmp.eq.s32.totalorder %s30, 3
      %p336 = por %p334, %p335
      %p337 = scmp.ne.s32.totalorder %s326, %s327
      %p338 = scmp.eq.s32.totalorder %s30, 0
      %p339 = por %p337, %p338
      %p340 = scmp.ne.s32.totalorder %s326, %s327
      %p341 = scmp.eq.s32.totalorder %s31, 3
      %p342 = por %p340, %p341
      %p344 = scmp.ne.s32.totalorder %s327, %s343
      %p345 = scmp.eq.s32.totalorder %s31, 0
      %p346 = por %p344, %p345
      %s347 = ssub.s32 %s33, %s40
      %p348 = scmp.eq.s32.totalorder %s347, 0
      %s350 = sadd.s32 %s349, 1
      %s351 = scalar_select %p348, %s349, %s350
      %p354 = pneg %p348
      %p355 = scmp.eq.s32.totalorder %s25, 3
      %p356 = por %p354, %p355
      %p357 = scmp.ne.s32.totalorder %s349, %s352
      %p358 = scmp.eq.s32.totalorder %s25, 0
      %p359 = por %p357, %p358
      %p360 = scmp.ne.s32.totalorder %s349, %s352
      %p361 = scmp.eq.s32.totalorder %s30, 3
      %p362 = por %p360, %p361
      %p363 = scmp.ne.s32.totalorder %s352, %s353
      %p364 = scmp.eq.s32.totalorder %s30, 0
      %p365 = por %p363, %p364
      %p366 = scmp.ne.s32.totalorder %s352, %s353
      %p367 = scmp.eq.s32.totalorder %s31, 3
      %p368 = por %p366, %p367
      %p370 = scmp.ne.s32.totalorder %s353, %s369
      %p371 = scmp.eq.s32.totalorder %s31, 0
      %p372 = por %p370, %p371
      %s373 = ssub.s32 %s33, %s40
      %p374 = scmp.eq.s32.totalorder %s373, 0
      %s376 = sadd.s32 %s375, 1
      %s377 = scalar_select %p374, %s375, %s376
      %p380 = pneg %p374
      %p381 = scmp.eq.s32.totalorder %s25, 3
      %p382 = por %p380, %p381
      %p383 = scmp.ne.s32.totalorder %s375, %s378
      %p384 = scmp.eq.s32.totalorder %s25, 0
      %p385 = por %p383, %p384
      %p386 = scmp.ne.s32.totalorder %s375, %s378
      %p387 = scmp.eq.s32.totalorder %s30, 3
      %p388 = por %p386, %p387
      %p389 = scmp.ne.s32.totalorder %s378, %s379
      %p390 = scmp.eq.s32.totalorder %s30, 0
      %p391 = por %p389, %p390
      %p392 = scmp.ne.s32.totalorder %s378, %s379
      %p393 = scmp.eq.s32.totalorder %s31, 3
      %p394 = por %p392, %p393
      %p396 = scmp.ne.s32.totalorder %s379, %s395
      %p397 = scmp.eq.s32.totalorder %s31, 0
      %p398 = por %p396, %p397
      %s399 = ssub.s32 %s33, %s40
      %p400 = scmp.eq.s32.totalorder %s399, 0
      %s402 = sadd.s32 %s401, 1
      %s403 = scalar_select %p400, %s401, %s402
      %p406 = pneg %p400
      %p407 = scmp.eq.s32.totalorder %s25, 3
      %p408 = por %p406, %p407
      %p409 = scmp.ne.s32.totalorder %s401, %s404
      %p410 = scmp.eq.s32.totalorder %s25, 0
      %p411 = por %p409, %p410
      %p412 = scmp.ne.s32.totalorder %s401, %s404
      %p413 = scmp.eq.s32.totalorder %s30, 3
      %p414 = por %p412, %p413
      %p415 = scmp.ne.s32.totalorder %s404, %s405
      %p416 = scmp.eq.s32.totalorder %s30, 0
      %p417 = por %p415, %p416
      %p418 = scmp.ne.s32.totalorder %s404, %s405
      %p419 = scmp.eq.s32.totalorder %s31, 3
      %p420 = por %p418, %p419
      %p422 = scmp.ne.s32.totalorder %s405, %s421
      %p423 = scmp.eq.s32.totalorder %s31, 0
      %p424 = por %p422, %p423
      %s425 = ssub.s32 %s33, %s40
      %p426 = scmp.eq.s32.totalorder %s425, 0
      %s428 = sadd.s32 %s427, 1
      %s429 = scalar_select %p426, %s427, %s428
      %p432 = pneg %p426
      %p433 = scmp.eq.s32.totalorder %s25, 3
      %p434 = por %p432, %p433
      %p435 = scmp.ne.s32.totalorder %s427, %s430
      %p436 = scmp.eq.s32.totalorder %s25, 0
      %p437 = por %p435, %p436
      %p438 = scmp.ne.s32.totalorder %s427, %s430
      %p439 = scmp.eq.s32.totalorder %s30, 3
      %p440 = por %p438, %p439
      %p441 = scmp.ne.s32.totalorder %s430, %s431
      %p442 = scmp.eq.s32.totalorder %s30, 0
      %p443 = por %p441, %p442
      %p444 = scmp.ne.s32.totalorder %s430, %s431
      %p445 = scmp.eq.s32.totalorder %s31, 3
      %p446 = por %p444, %p445
      %p448 = scmp.ne.s32.totalorder %s431, %s447
      %p449 = scmp.eq.s32.totalorder %s31, 0
      %p450 = por %p448, %p449
      %s451 = ssub.s32 %s32, %s44
      %p452 = scmp.eq.s32.totalorder %s451, 0
      %s454 = sadd.s32 %s453, 1
      %s455 = scalar_select %p452, %s453, %s454
      %p458 = pneg %p452
      %p459 = scmp.eq.s32.totalorder %s25, 3
      %p460 = por %p458, %p459
      %p461 = scmp.ne.s32.totalorder %s453, %s456
      %p462 = scmp.eq.s32.totalorder %s25, 0
      %p463 = por %p461, %p462
      %p464 = scmp.ne.s32.totalorder %s453, %s456
      %p465 = scmp.eq.s32.totalorder %s30, 3
      %p466 = por %p464, %p465
      %p467 = scmp.ne.s32.totalorder %s456, %s457
      %p468 = scmp.eq.s32.totalorder %s30, 0
      %p469 = por %p467, %p468
      %p470 = scmp.ne.s32.totalorder %s456, %s457
      %p471 = scmp.eq.s32.totalorder %s31, 3
      %p472 = por %p470, %p471
      %p474 = scmp.ne.s32.totalorder %s457, %s473
      %p475 = scmp.eq.s32.totalorder %s31, 0
      %p476 = por %p474, %p475
      %p477 = scmp.le.s32.totalorder 1, %s25
      %p478 = scmp.lt.s32.totalorder %s25, 5
      %p479 = pnand %p477, %p478
      %p480 = pneg %p479
      // Predicated region
      $region9: #{cobra_forward.1} parent=5 // pred_check
        _
      $region10: #{cobra_forward.1} parent=5 // pred_check_branch
        %482 = sbr.rel (%p479) target = $region12
      $region11: #{cobra_forward.1} parent=5 // pred_region
        %s483 = ssub.s32 %s25, 1
        // Predicated region
        $region13: #{cobra_forward.1} parent=11 // pred_check
          %p484 = pneg %p84
        $region14: #{cobra_forward.1} parent=11 // pred_check_branch
          %486 = sbr.rel (%p484) target = $region16
        $region15: #{cobra_forward.1} parent=11 // pred_region
          _
        $region16: #{cobra_forward.1} parent=11 // pred_fallthru
          _
        // Predicated region
        $region17: #{cobra_forward.1} parent=11 // pred_check
          %p487 = pneg %p105
        $region18: #{cobra_forward.1} parent=11 // pred_check_branch
          %489 = sbr.rel (%p487) target = $region20
        $region19: #{cobra_forward.1} parent=11 // pred_region
          _
        $region20: #{cobra_forward.1} parent=11 // pred_fallthru
          _
      $region12: #{cobra_forward.1} parent=5 // pred_fallthru
        _
      %p490 = scmp.lt.s32.totalorder %s25, 4
      // Predicated region
      $region21: #{cobra_forward.1} parent=5 // pred_check
        %p491 = pneg %p490
      $region22: #{cobra_forward.1} parent=5 // pred_check_branch
        %493 = sbr.rel (%p491) target = $region24
      $region23: #{cobra_forward.1} parent=5 // pred_region
        // Predicated region
        $region25: #{cobra_forward.1} parent=23 // pred_check
          %p494 = pneg %p57
        $region26: #{cobra_forward.1} parent=23 // pred_check_branch
          %496 = sbr.rel (%p494) target = $region28
        $region27: #{cobra_forward.1} parent=23 // pred_region
          %p497 = scmp.lt.s32.totalorder %s32, 1
          %s498 = scalar_select %p497, %s32, 1
          %s499 = smul.addr %s498, 8
          %s500 = scalar_lea.vmem %s0, %s499
        $region28: #{cobra_forward.1} parent=23 // pred_fallthru
          _
        // Predicated region
        $region29: #{cobra_forward.1} parent=23 // pred_check
          %p501 = pneg %p125
        $region30: #{cobra_forward.1} parent=23 // pred_check_branch
          %503 = sbr.rel (%p501) target = $region32
        $region31: #{cobra_forward.1} parent=23 // pred_region
          %p504 = scmp.lt.s32.totalorder %s33, 1
          %s505 = scalar_select %p504, %s33, 1
          %s506 = smul.addr %s505, 16
          %s507 = smul.addr %s506, 4
          %s508 = scalar_lea.vmem %s3, %s507
        $region32: #{cobra_forward.1} parent=23 // pred_fallthru
          _
        // Predicated region
        $region33: #{cobra_forward.1} parent=23 // pred_check
          %p509 = pneg %p151
        $region34: #{cobra_forward.1} parent=23 // pred_check_branch
          %511 = sbr.rel (%p509) target = $region36
        $region35: #{cobra_forward.1} parent=23 // pred_region
          %p512 = scmp.lt.s32.totalorder %s33, 1
          %s513 = scalar_select %p512, %s33, 1
          %s514 = scalar_lea.vmem %s4, %s513
        $region36: #{cobra_forward.1} parent=23 // pred_fallthru
          _
        // Predicated region
        $region37: #{cobra_forward.1} parent=23 // pred_check
          %p515 = pneg %p177
        $region38: #{cobra_forward.1} parent=23 // pred_check_branch
          %517 = sbr.rel (%p515) target = $region40
        $region39: #{cobra_forward.1} parent=23 // pred_region
          %p518 = scmp.lt.s32.totalorder %s33, 1
          %s519 = scalar_select %p518, %s33, 1
          %s520 = smul.addr %s519, 4
          %s521 = scalar_lea.vmem %s5, %s520
        $region40: #{cobra_forward.1} parent=23 // pred_fallthru
          _
        // Predicated region
        $region41: #{cobra_forward.1} parent=23 // pred_check
          %p522 = pneg %p203
        $region42: #{cobra_forward.1} parent=23 // pred_check_branch
          %524 = sbr.rel (%p522) target = $region44
        $region43: #{cobra_forward.1} parent=23 // pred_region
          %p525 = scmp.lt.s32.totalorder %s33, 1
          %s526 = scalar_select %p525, %s33, 1
          %s527 = smul.addr %s526, 4
          %s528 = scalar_lea.vmem %s6, %s527
        $region44: #{cobra_forward.1} parent=23 // pred_fallthru
          _
        // Predicated region
        $region45: #{cobra_forward.1} parent=23 // pred_check
          %p529 = pneg %p229
        $region46: #{cobra_forward.1} parent=23 // pred_check_branch
          %531 = sbr.rel (%p529) target = $region48
        $region47: #{cobra_forward.1} parent=23 // pred_region
          %p532 = scmp.lt.s32.totalorder %s33, 1
          %s533 = scalar_select %p532, %s33, 1
          %s534 = smul.addr %s533, 4
          %s535 = scalar_lea.vmem %s7, %s534
        $region48: #{cobra_forward.1} parent=23 // pred_fallthru
          _
        // Predicated region
        $region49: #{cobra_forward.1} parent=23 // pred_check
          %p536 = pneg %p255
        $region50: #{cobra_forward.1} parent=23 // pred_check_branch
          %538 = sbr.rel (%p536) target = $region52
        $region51: #{cobra_forward.1} parent=23 // pred_region
          %p539 = scmp.lt.s32.totalorder %s33, 1
          %s540 = scalar_select %p539, %s33, 1
          %s541 = smul.addr %s540, 8
          %s542 = scalar_lea.vmem %s8, %s541
        $region52: #{cobra_forward.1} parent=23 // pred_fallthru
          _
        // Predicated region
        $region53: #{cobra_forward.1} parent=23 // pred_check
          %p543 = pneg %p281
        $region54: #{cobra_forward.1} parent=23 // pred_check_branch
          %545 = sbr.rel (%p543) target = $region56
        $region55: #{cobra_forward.1} parent=23 // pred_region
          %p546 = scmp.lt.s32.totalorder %s33, 1
          %s547 = scalar_select %p546, %s33, 1
          %s548 = smul.addr %s547, 16
          %s549 = smul.addr %s548, 4
          %s550 = scalar_lea.vmem %s9, %s549
        $region56: #{cobra_forward.1} parent=23 // pred_fallthru
          _
        // Predicated region
        $region57: #{cobra_forward.1} parent=23 // pred_check
          %p551 = pneg %p307
        $region58: #{cobra_forward.1} parent=23 // pred_check_branch
          %553 = sbr.rel (%p551) target = $region60
        $region59: #{cobra_forward.1} parent=23 // pred_region
          %p554 = scmp.lt.s32.totalorder %s33, 1
          %s555 = scalar_select %p554, %s33, 1
          %s556 = smul.addr %s555, 16
          %s557 = smul.addr %s556, 4
          %s558 = scalar_lea.vmem %s10, %s557
        $region60: #{cobra_forward.1} parent=23 // pred_fallthru
          _
        // Predicated region
        $region61: #{cobra_forward.1} parent=23 // pred_check
          %p559 = pneg %p333
        $region62: #{cobra_forward.1} parent=23 // pred_check_branch
          %561 = sbr.rel (%p559) target = $region64
        $region63: #{cobra_forward.1} parent=23 // pred_region
          %p562 = scmp.lt.s32.totalorder %s33, 1
          %s563 = scalar_select %p562, %s33, 1
          %s564 = smul.addr %s563, 16
          %s565 = smul.addr %s564, 4
          %s566 = scalar_lea.vmem %s11, %s565
        $region64: #{cobra_forward.1} parent=23 // pred_fallthru
          _
        // Predicated region
        $region65: #{cobra_forward.1} parent=23 // pred_check
          %p567 = pneg %p359
        $region66: #{cobra_forward.1} parent=23 // pred_check_branch
          %569 = sbr.rel (%p567) target = $region68
        $region67: #{cobra_forward.1} parent=23 // pred_region
          %p570 = scmp.lt.s32.totalorder %s33, 1
          %s571 = scalar_select %p570, %s33, 1
          %s572 = smul.addr %s571, 4
          %s573 = scalar_lea.vmem %s12, %s572
        $region68: #{cobra_forward.1} parent=23 // pred_fallthru
          _
        // Predicated region
        $region69: #{cobra_forward.1} parent=23 // pred_check
          %p574 = pneg %p385
        $region70: #{cobra_forward.1} parent=23 // pred_check_branch
          %576 = sbr.rel (%p574) target = $region72
        $region71: #{cobra_forward.1} parent=23 // pred_region
          %p577 = scmp.lt.s32.totalorder %s33, 1
          %s578 = scalar_select %p577, %s33, 1
          %s579 = scalar_lea.vmem %s13, %s578
        $region72: #{cobra_forward.1} parent=23 // pred_fallthru
          _
        // Predicated region
        $region73: #{cobra_forward.1} parent=23 // pred_check
          %p580 = pneg %p411
        $region74: #{cobra_forward.1} parent=23 // pred_check_branch
          %582 = sbr.rel (%p580) target = $region76
        $region75: #{cobra_forward.1} parent=23 // pred_region
          %p583 = scmp.lt.s32.totalorder %s33, 1
          %s584 = scalar_select %p583, %s33, 1
          %s585 = smul.addr %s584, 2
          %s586 = smul.addr %s585, 8
          %s587 = scalar_lea.vmem %s14, %s586
        $region76: #{cobra_forward.1} parent=23 // pred_fallthru
          _
        // Predicated region
        $region77: #{cobra_forward.1} parent=23 // pred_check
          %p588 = pneg %p437
        $region78: #{cobra_forward.1} parent=23 // pred_check_branch
          %590 = sbr.rel (%p588) target = $region80
        $region79: #{cobra_forward.1} parent=23 // pred_region
          %p591 = scmp.lt.s32.totalorder %s33, 1
          %s592 = scalar_select %p591, %s33, 1
          %s593 = scalar_lea.vmem %s15, %s592
        $region80: #{cobra_forward.1} parent=23 // pred_fallthru
          _
      $region24: #{cobra_forward.1} parent=5 // pred_fallthru
        _
      %p594 = scmp.le.s32.totalorder 1, %s25
      %p595 = scmp.lt.s32.totalorder %s25, 5
      %p596 = pnand %p594, %p595
      %p597 = pneg %p596
      // Predicated region
      $region81: #{cobra_forward.1} parent=5 // pred_check
        _
      $region82: #{cobra_forward.1} parent=5 // pred_check_branch
        %599 = sbr.rel (%p596) target = $region84
      $region83: #{cobra_forward.1} parent=5 // pred_region
        %s600 = ssub.s32 %s25, 1
        %p601 = scmp.lt.s32.totalorder %s34, 1
        %s602 = scalar_select %p601, %s34, 1
        %s603 = smul.addr %s602, 8
        %s604 = scalar_lea.vmem %s0, %s603
        %p605 = pneg %p63
        %p606 = pneg %p60
        %p607 = pneg %p84
        %p608 = pneg %p81
        %p609 = pneg %p105
        %p610 = pneg %p102
        %p611 = scmp.lt.s32.totalorder %s35, 1
        %s612 = scalar_select %p611, %s35, 1
        %s613 = smul.addr %s612, 16
        %s614 = smul.addr %s613, 4
        %s615 = scalar_lea.vmem %s3, %s614
        %p616 = pneg %p131
        %p617 = pneg %p128
        %p618 = scmp.lt.s32.totalorder %s35, 1
        %s619 = scalar_select %p618, %s35, 1
        %s620 = scalar_lea.vmem %s4, %s619
        %p621 = pneg %p157
        %p622 = pneg %p154
        %p623 = scmp.lt.s32.totalorder %s35, 1
        %s624 = scalar_select %p623, %s35, 1
        %s625 = smul.addr %s624, 4
        %s626 = scalar_lea.vmem %s5, %s625
        %p627 = pneg %p183
        %p628 = pneg %p180
        %p629 = scmp.lt.s32.totalorder %s35, 1
        %s630 = scalar_select %p629, %s35, 1
        %s631 = smul.addr %s630, 4
        %s632 = scalar_lea.vmem %s6, %s631
        %p633 = pneg %p209
        %p634 = pneg %p206
        %p635 = scmp.lt.s32.totalorder %s35, 1
        %s636 = scalar_select %p635, %s35, 1
        %s637 = smul.addr %s636, 4
        %s638 = scalar_lea.vmem %s7, %s637
        %p639 = pneg %p235
        %p640 = pneg %p232
        %p641 = scmp.lt.s32.totalorder %s35, 1
        %s642 = scalar_select %p641, %s35, 1
        %s643 = smul.addr %s642, 8
        %s644 = scalar_lea.vmem %s8, %s643
        %p645 = pneg %p261
        %p646 = pneg %p258
        %p647 = scmp.lt.s32.totalorder %s35, 1
        %s648 = scalar_select %p647, %s35, 1
        %s649 = smul.addr %s648, 16
        %s650 = smul.addr %s649, 4
        %s651 = scalar_lea.vmem %s9, %s650
        %p652 = pneg %p287
        %p653 = pneg %p284
        %p654 = scmp.lt.s32.totalorder %s35, 1
        %s655 = scalar_select %p654, %s35, 1
        %s656 = smul.addr %s655, 16
        %s657 = smul.addr %s656, 4
        %s658 = scalar_lea.vmem %s10, %s657
        %p659 = pneg %p313
        %p660 = pneg %p310
        %p661 = scmp.lt.s32.totalorder %s35, 1
        %s662 = scalar_select %p661, %s35, 1
        %s663 = smul.addr %s662, 16
        %s664 = smul.addr %s663, 4
        %s665 = scalar_lea.vmem %s11, %s664
        %p666 = pneg %p339
        %p667 = pneg %p336
        %p668 = scmp.lt.s32.totalorder %s35, 1
        %s669 = scalar_select %p668, %s35, 1
        %s670 = smul.addr %s669, 4
        %s671 = scalar_lea.vmem %s12, %s670
        %p672 = pneg %p365
        %p673 = pneg %p362
        %p674 = scmp.lt.s32.totalorder %s35, 1
        %s675 = scalar_select %p674, %s35, 1
        %s676 = scalar_lea.vmem %s13, %s675
        %p677 = pneg %p391
        %p678 = pneg %p388
        %p679 = scmp.lt.s32.totalorder %s35, 1
        %s680 = scalar_select %p679, %s35, 1
        %s681 = smul.addr %s680, 2
        %s682 = smul.addr %s681, 8
        %s683 = scalar_lea.vmem %s14, %s682
        %p684 = pneg %p417
        %p685 = pneg %p414
        %p686 = scmp.lt.s32.totalorder %s35, 1
        %s687 = scalar_select %p686, %s35, 1
        %s688 = scalar_lea.vmem %s15, %s687
        %p689 = pneg %p443
        %p690 = pneg %p440
        %p691 = pneg %p469
        %p692 = pneg %p466
        %s693 = sand.u32 %s456, 1
        %s694 = scalar_lea.sflag [#allocation4], %s693
        %s695 = sand.u32 %s456, 1
        %s696 = smul.addr %s695, 8
        %s697 = scalar_lea.vmem [#allocation3], %s696
        %p698 = scmp.lt.s32.totalorder %s34, 1
        %s699 = scalar_select %p698, %s34, 1
        %s700 = smul.addr %s699, 8
        %s701 = scalar_lea.vmem %s0, %s700
        %p702 = scmp.lt.s32.totalorder %s35, 1
        %s703 = scalar_select %p702, %s35, 1
        %s704 = smul.addr %s703, 16
        %s705 = smul.addr %s704, 4
        %s706 = scalar_lea.vmem %s3, %s705
        %p707 = scmp.lt.s32.totalorder %s35, 1
        %s708 = scalar_select %p707, %s35, 1
        %s709 = scalar_lea.vmem %s4, %s708
        %p710 = scmp.lt.s32.totalorder %s35, 1
        %s711 = scalar_select %p710, %s35, 1
        %s712 = smul.addr %s711, 4
        %s713 = scalar_lea.vmem %s5, %s712
        %p714 = scmp.lt.s32.totalorder %s35, 1
        %s715 = scalar_select %p714, %s35, 1
        %s716 = smul.addr %s715, 4
        %s717 = scalar_lea.vmem %s6, %s716
        %p718 = scmp.lt.s32.totalorder %s35, 1
        %s719 = scalar_select %p718, %s35, 1
        %s720 = smul.addr %s719, 4
        %s721 = scalar_lea.vmem %s7, %s720
        %p722 = scmp.lt.s32.totalorder %s35, 1
        %s723 = scalar_select %p722, %s35, 1
        %s724 = smul.addr %s723, 8
        %s725 = scalar_lea.vmem %s8, %s724
        %p726 = scmp.lt.s32.totalorder %s35, 1
        %s727 = scalar_select %p726, %s35, 1
        %s728 = smul.addr %s727, 16
        %s729 = smul.addr %s728, 4
        %s730 = scalar_lea.vmem %s9, %s729
        %p731 = scmp.lt.s32.totalorder %s35, 1
        %s732 = scalar_select %p731, %s35, 1
        %s733 = smul.addr %s732, 16
        %s734 = smul.addr %s733, 4
        %s735 = scalar_lea.vmem %s10, %s734
        %p736 = scmp.lt.s32.totalorder %s35, 1
        %s737 = scalar_select %p736, %s35, 1
        %s738 = smul.addr %s737, 16
        %s739 = smul.addr %s738, 4
        %s740 = scalar_lea.vmem %s11, %s739
        %p741 = scmp.lt.s32.totalorder %s35, 1
        %s742 = scalar_select %p741, %s35, 1
        %s743 = smul.addr %s742, 4
        %s744 = scalar_lea.vmem %s12, %s743
        %p745 = scmp.lt.s32.totalorder %s35, 1
        %s746 = scalar_select %p745, %s35, 1
        %s747 = scalar_lea.vmem %s13, %s746
        %p748 = scmp.lt.s32.totalorder %s35, 1
        %s749 = scalar_select %p748, %s35, 1
        %s750 = smul.addr %s749, 2
        %s751 = smul.addr %s750, 8
        %s752 = scalar_lea.vmem %s14, %s751
        %p753 = scmp.lt.s32.totalorder %s35, 1
        %s754 = scalar_select %p753, %s35, 1
        %s755 = scalar_lea.vmem %s15, %s754
        %v757 = vld [vmem:[%s1] sm:$0x1]
        %v758 = vld [vmem:[%s2] sm:$0x1]
        %p759 = scmp.eq.s32.totalorder %s35, 0
        // Predicated region
        $region85: #{cobra_forward.1} parent=83 // pred_check
          %p760 = pneg %p759
        $region86: #{cobra_forward.1} parent=83 // pred_check_branch
          %762 = sbr.rel (%p760) target = $region88
        $region87: #{cobra_forward.1} parent=83 // pred_region
          %v763 = vld [vmem:[%s701] sm:$0xff]
          %764 = vadd.xlane.f32.xlu0 %v763
          %v765 = vpop.xlane.xlu0 %764
          %v766 = vrcp.pop 128.0
          %v767 = vmul.f32 %v765, %v766
          %v768 = vsub.f32 %v763, %v767
          %v769 = vmul.f32 %v768, %v768
          %770 = vadd.xlane.f32.xlu0 %v769
          %v771 = vpop.xlane.xlu0 %770
          %v772 = vmul.f32 %v771, %v766
          %v773 = vadd.f32 %v772, 1e-05
          %v774 = vrsqrt.pop %v773
          %v775 = vmul.f32 %v768, %v774
          %v777 = vlaneseq
          %v778 = vshrl.u32 %v777, 7
          %v779 = vsub.s32 0, %v778
          %v780 = vrot.slane %v757, %v779
          %v782 = vmul.f32 %v775, %v780
          %v784 = vlaneseq
          %v785 = vshrl.u32 %v784, 7
          %v786 = vsub.s32 0, %v785
          %v787 = vrot.slane %v758, %v786
          %v789 = vadd.f32 %v782, %v787
          %790 = vst [vmem:[#allocation2] sm:$0xff] %v789
        $region88: #{cobra_forward.1} parent=83 // pred_fallthru
          _
        %v791 = vld [vmem:[#allocation2] sm:$0xff]
        %v792 = vld [vmem:[%s706] sm:$0xf]
        %v793 = vld [vmem:[%s706 + $0x4] sm:$0xf]
        %v794 = vld [vmem:[%s706 + $0x8] sm:$0xf]
        %v795 = vld [vmem:[%s706 + $0xc] sm:$0xf]
        %v796 = vld [vmem:[%s706 + $0x10] sm:$0xf]
        %v797 = vld [vmem:[%s706 + $0x14] sm:$0xf]
        %v798 = vld [vmem:[%s706 + $0x18] sm:$0xf]
        %v799 = vld [vmem:[%s706 + $0x1c] sm:$0xf]
        %v800 = vld [vmem:[%s706 + $0x20] sm:$0xf]
        %v801 = vld [vmem:[%s706 + $0x24] sm:$0xf]
        %v802 = vld [vmem:[%s706 + $0x28] sm:$0xf]
        %v803 = vld [vmem:[%s706 + $0x2c] sm:$0xf]
        %v804 = vld [vmem:[%s706 + $0x30] sm:$0xf]
        %v805 = vld [vmem:[%s706 + $0x34] sm:$0xf]
        %v806 = vld [vmem:[%s706 + $0x38] sm:$0xf]
        %v807 = vld [vmem:[%s706 + $0x3c] sm:$0xf]
        %v808 = vld [vmem:[%s709] sm:$0x1]
        %v809 = vpack.c.bf16 %v791, %v791
        %v811 = vlaneseq
        %v812 = vshrl.u32 %v811, 7
        %v813 = vsub.s32 0, %v812
        %v814 = vrot.slane %v808, %v813
        %v832 = vunpack.c.l.b16 %v792
        %v833 = vunpack.c.l.b16 %v793
        %v834 = vunpack.c.l.b16 %v794
        %v835 = vunpack.c.l.b16 %v795
        %v836 = vunpack.c.l.b16 %v796
        %v837 = vunpack.c.l.b16 %v797
        %v838 = vunpack.c.l.b16 %v798
        %v839 = vunpack.c.l.b16 %v799
        %v840 = vunpack.c.l.b16 %v800
        %v841 = vunpack.c.l.b16 %v801
        %v842 = vunpack.c.l.b16 %v802
        %v843 = vunpack.c.l.b16 %v803
        %v844 = vunpack.c.l.b16 %v804
        %v845 = vunpack.c.l.b16 %v805
        %v846 = vunpack.c.l.b16 %v806
        %v847 = vunpack.c.l.b16 %v807
        %v848 = vpack.c.b16 %v833, %v832
        %v849 = vpack.c.b16 %v835, %v834
        %v850 = vpack.c.b16 %v837, %v836
        %v851 = vpack.c.b16 %v839, %v838
        %v852 = vpack.c.b16 %v841, %v840
        %v853 = vpack.c.b16 %v843, %v842
        %v854 = vpack.c.b16 %v845, %v844
        %v855 = vpack.c.b16 %v847, %v846
        %864 = vmatprep.subr.bf16.mxu0 0
        %865 = vmatpush1.bf16.msra.mxu0 %v855
        %866 = vmatprep.subr.bf16.mxu0 0
        %867 = vmatpush1.bf16.msra.mxu0 %v854
        %868 = vmatprep.subr.bf16.mxu0 0
        %869 = vmatpush1.bf16.msra.mxu0 %v853
        %870 = vmatprep.subr.bf16.mxu0 0
        %871 = vmatpush1.bf16.msra.mxu0 %v852
        %872 = vmatprep.subr.bf16.mxu0 0
        %873 = vmatpush1.bf16.msra.mxu0 %v851
        %874 = vmatprep.subr.bf16.mxu0 0
        %875 = vmatpush1.bf16.msra.mxu0 %v850
        %876 = vmatprep.subr.bf16.mxu0 0
        %877 = vmatpush1.bf16.msra.mxu0 %v849
        %878 = vmatprep.subr.bf16.mxu0 0
        %879 = vmatpush1.bf16.msra.mxu0 %v848
        %880 = vmatprep.subr.bf16.mxu0 0
        %881 = vmatpush2.bf16.msra.mxu0 0
        %882 = vmatprep.subr.bf16.mxu0 0
        %883 = vmatpush2.bf16.msra.mxu0 0
        %884 = vmatprep.subr.bf16.mxu0 0
        %885 = vmatpush2.bf16.msra.mxu0 0
        %886 = vmatprep.subr.bf16.mxu0 0
        %887 = vmatpush2.bf16.msra.mxu0 0
        %888 = vmatprep.subr.bf16.mxu0 0
        %889 = vmatpush2.bf16.msra.mxu0 0
        %890 = vmatprep.subr.bf16.mxu0 0
        %891 = vmatpush2.bf16.msra.mxu0 0
        %892 = vmatprep.subr.bf16.mxu0 0
        %893 = vmatpush2.bf16.msra.mxu0 0
        %894 = vmatprep.subr.bf16.mxu0 0
        %895 = vmatpush2.bf16.msra.mxu0 0
        %896 = vmatprep.mubr.bf16.mxu0 0
        %897 = vmatmul.mubr.bf16.gmra.mxu0 %v809
        %v898 = vpop.f32.mrf.mxu0
        %v899 = vadd.f32 %v814, %v898
        %v900 = vpop.f32.mrf.mxu0
        %v901 = vpop.f32.mrf.mxu0
        %v902 = vpop.f32.mrf.mxu0
        %903 = vdwg.mxu0
        %v904 = vlaneseq
        %v905 = vand.u32 %v904, 127
        %vm906 = vcmp.eq.s32.totalorder %v905, 0
        %907 = vrot.lane.b32.xlu0 %v899, 1
        %v908 = vpop.permute.xlu0 %907
        %v909 = vsel %vm906, 0.0, %v908
        %vm910 = vcmp.eq.s32.totalorder %v905, 127
        %911 = vrot.lane.b32.xlu0 %v899, 127
        %v912 = vpop.permute.xlu0 %911
        %v913 = vsel %vm910, 0.0, %v912
        %v914 = vld [vmem:[%s713] sm:$0xf]
        %v915 = vpack.c.bf16 %v909, %v909
        %v916 = vld [vmem:[%s717] sm:$0xf]
        %v917 = vpack.c.bf16 %v899, %v899
        %vm918 = vcmask 64512
        %v920 = vsel %vm918, %v916, 0
        %vm922 = vcmask 1043456
        %v924 = vsel %vm922, %v917, 0
        %926 = vmatprep.subr.bf16.mxu0 0
        %927 = vmatpush1.bf16.msra.mxu0 0
        %928 = vmatprep.subr.bf16.mxu0 0
        %929 = vmatpush1.bf16.msra.mxu0 0
        %930 = vmatprep.subr.bf16.mxu0 0
        %931 = vmatpush1.bf16.msra.mxu0 0
        %932 = vmatprep.subr.bf16.mxu0 0
        %933 = vmatpush1.bf16.msra.mxu0 0
        %934 = vmatprep.subr.bf16.mxu0 0
        %935 = vmatpush1.bf16.msra.mxu0 0
        %936 = vmatprep.subr.bf16.mxu0 0
        %937 = vmatpush1.bf16.msra.mxu0 0
        %938 = vmatprep.subr.bf16.mxu0 0
        %939 = vmatpush1.bf16.msra.mxu0 0
        %940 = vmatprep.subr.bf16.mxu0 0
        %941 = vmatpush1.bf16.msra.mxu0 %v924
        %942 = vmatprep.subr.bf16.mxu0 0
        %943 = vmatpush2.bf16.msra.mxu0 0
        %944 = vmatprep.subr.bf16.mxu0 0
        %945 = vmatpush2.bf16.msra.mxu0 0
        %946 = vmatprep.subr.bf16.mxu0 0
        %947 = vmatpush2.bf16.msra.mxu0 0
        %948 = vmatprep.subr.bf16.mxu0 0
        %949 = vmatpush2.bf16.msra.mxu0 0
        %950 = vmatprep.subr.bf16.mxu0 0
        %951 = vmatpush2.bf16.msra.mxu0 0
        %952 = vmatprep.subr.bf16.mxu0 0
        %953 = vmatpush2.bf16.msra.mxu0 0
        %954 = vmatprep.subr.bf16.mxu0 0
        %955 = vmatpush2.bf16.msra.mxu0 0
        %956 = vmatprep.subr.bf16.mxu0 0
        %957 = vmatpush2.bf16.msra.mxu0 0
        %958 = vmatprep.mubr.bf16.mxu0 0
        %959 = vmatmul.mubr.bf16.gmra.mxu0 %v920
        %v960 = vpop.f32.mrf.mxu0
        %v961 = vadd.f32 0.0, %v960
        %v962 = vpop.f32.mrf.mxu0
        %v963 = vpop.f32.mrf.mxu0
        %v964 = vpop.f32.mrf.mxu0
        %965 = vdwg.mxu0
        %v967 = vsel %vm918, %v914, 0
        %v970 = vsel %vm922, %v915, 0
        %972 = vmatprep.subr.bf16.mxu0 0
        %973 = vmatpush1.bf16.msra.mxu0 0
        %974 = vmatprep.subr.bf16.mxu0 0
        %975 = vmatpush1.bf16.msra.mxu0 0
        %976 = vmatprep.subr.bf16.mxu0 0
        %977 = vmatpush1.bf16.msra.mxu0 0
        %978 = vmatprep.subr.bf16.mxu0 0
        %979 = vmatpush1.bf16.msra.mxu0 0
        %980 = vmatprep.subr.bf16.mxu0 0
        %981 = vmatpush1.bf16.msra.mxu0 0
        %982 = vmatprep.subr.bf16.mxu0 0
        %983 = vmatpush1.bf16.msra.mxu0 0
        %984 = vmatprep.subr.bf16.mxu0 0
        %985 = vmatpush1.bf16.msra.mxu0 0
        %986 = vmatprep.subr.bf16.mxu0 0
        %987 = vmatpush1.bf16.msra.mxu0 %v970
        %988 = vmatprep.subr.bf16.mxu0 0
        %989 = vmatpush2.bf16.msra.mxu0 0
        %990 = vmatprep.subr.bf16.mxu0 0
        %991 = vmatpush2.bf16.msra.mxu0 0
        %992 = vmatprep.subr.bf16.mxu0 0
        %993 = vmatpush2.bf16.msra.mxu0 0
        %994 = vmatprep.subr.bf16.mxu0 0
        %995 = vmatpush2.bf16.msra.mxu0 0
        %996 = vmatprep.subr.bf16.mxu0 0
        %997 = vmatpush2.bf16.msra.mxu0 0
        %998 = vmatprep.subr.bf16.mxu0 0
        %999 = vmatpush2.bf16.msra.mxu0 0
        %1000 = vmatprep.subr.bf16.mxu0 0
        %1001 = vmatpush2.bf16.msra.mxu0 0
        %1002 = vmatprep.subr.bf16.mxu0 0
        %1003 = vmatpush2.bf16.msra.mxu0 0
        %1004 = vmatprep.mubr.bf16.mxu0 0
        %1005 = vmatmul.mubr.bf16.gmra.mxu0 %v967
        %v1006 = vpop.f32.mrf.mxu0
        %v1007 = vadd.f32 %v961, %v1006
        %v1008 = vpop.f32.mrf.mxu0
        %v1009 = vpop.f32.mrf.mxu0
        %v1010 = vpop.f32.mrf.mxu0
        %1011 = vdwg.mxu0
        %v1012 = vld [vmem:[%s721] sm:$0xf]
        %v1013 = vpack.c.bf16 %v913, %v913
        %v1015 = vsel %vm918, %v1012, 0
        %v1018 = vsel %vm922, %v1013, 0
        %1020 = vmatprep.subr.bf16.mxu0 0
        %1021 = vmatpush1.bf16.msra.mxu0 0
        %1022 = vmatprep.subr.bf16.mxu0 0
        %1023 = vmatpush1.bf16.msra.mxu0 0
        %1024 = vmatprep.subr.bf16.mxu0 0
        %1025 = vmatpush1.bf16.msra.mxu0 0
        %1026 = vmatprep.subr.bf16.mxu0 0
        %1027 = vmatpush1.bf16.msra.mxu0 0
        %1028 = vmatprep.subr.bf16.mxu0 0
        %1029 = vmatpush1.bf16.msra.mxu0 0
        %1030 = vmatprep.subr.bf16.mxu0 0
        %1031 = vmatpush1.bf16.msra.mxu0 0
        %1032 = vmatprep.subr.bf16.mxu0 0
        %1033 = vmatpush1.bf16.msra.mxu0 0
        %1034 = vmatprep.subr.bf16.mxu0 0
        %1035 = vmatpush1.bf16.msra.mxu0 %v1018
        %1036 = vmatprep.subr.bf16.mxu0 0
        %1037 = vmatpush2.bf16.msra.mxu0 0
        %1038 = vmatprep.subr.bf16.mxu0 0
        %1039 = vmatpush2.bf16.msra.mxu0 0
        %1040 = vmatprep.subr.bf16.mxu0 0
        %1041 = vmatpush2.bf16.msra.mxu0 0
        %1042 = vmatprep.subr.bf16.mxu0 0
        %1043 = vmatpush2.bf16.msra.mxu0 0
        %1044 = vmatprep.subr.bf16.mxu0 0
        %1045 = vmatpush2.bf16.msra.mxu0 0
        %1046 = vmatprep.subr.bf16.mxu0 0
        %1047 = vmatpush2.bf16.msra.mxu0 0
        %1048 = vmatprep.subr.bf16.mxu0 0
        %1049 = vmatpush2.bf16.msra.mxu0 0
        %1050 = vmatprep.subr.bf16.mxu0 0
        %1051 = vmatpush2.bf16.msra.mxu0 0
        %1052 = vmatprep.mubr.bf16.mxu0 0
        %1053 = vmatmul.mubr.bf16.gmra.mxu0 %v1015
        %v1054 = vpop.f32.mrf.mxu0
        %v1055 = vadd.f32 0.0, %v1054
        %v1056 = vpop.f32.mrf.mxu0
        %v1057 = vpop.f32.mrf.mxu0
        %v1058 = vpop.f32.mrf.mxu0
        %1059 = vdwg.mxu0
        %v1060 = vadd.f32 %v1007, %v1055
        %v1061 = vld [vmem:[%s725] sm:$0xff]
        %1063 = vset.pattern.permute.xlu0 0
        %1064 = vperm.xlu0 %1063, %v1061
        %v1065 = vpop.permute.xlu0 %1064
        %v1067 = vadd.f32 %v1060, %v1065
        %v1068 = vsub.f32 0.0, %v1067
        %v1069 = vmul.f32 %v1068, 1.442695
        %v1070 = vpow.pop %v1069
        %v1071 = vadd.f32 %v1070, 1.0
        %v1072 = vrcp.pop %v1071
        %v1073 = vmul.f32 1.0, %v1072
        %v1074 = vmul.f32 %v1067, %v1073
        %v1075 = vpack.c.bf16 %v1074, %v1074
        %v1076 = vld [vmem:[%s730] sm:$0xf]
        %v1077 = vld [vmem:[%s730 + $0x4] sm:$0xf]
        %v1078 = vld [vmem:[%s730 + $0x8] sm:$0xf]
        %v1079 = vld [vmem:[%s730 + $0xc] sm:$0xf]
        %v1080 = vld [vmem:[%s730 + $0x10] sm:$0xf]
        %v1081 = vld [vmem:[%s730 + $0x14] sm:$0xf]
        %v1082 = vld [vmem:[%s730 + $0x18] sm:$0xf]
        %v1083 = vld [vmem:[%s730 + $0x1c] sm:$0xf]
        %v1084 = vld [vmem:[%s730 + $0x20] sm:$0xf]
        %v1085 = vld [vmem:[%s730 + $0x24] sm:$0xf]
        %v1086 = vld [vmem:[%s730 + $0x28] sm:$0xf]
        %v1087 = vld [vmem:[%s730 + $0x2c] sm:$0xf]
        %v1088 = vld [vmem:[%s730 + $0x30] sm:$0xf]
        %v1089 = vld [vmem:[%s730 + $0x34] sm:$0xf]
        %v1090 = vld [vmem:[%s730 + $0x38] sm:$0xf]
        %v1091 = vld [vmem:[%s730 + $0x3c] sm:$0xf]
        %v1108 = vunpack.c.l.b16 %v1076
        %v1109 = vunpack.c.l.b16 %v1077
        %v1110 = vunpack.c.l.b16 %v1078
        %v1111 = vunpack.c.l.b16 %v1079
        %v1112 = vunpack.c.l.b16 %v1080
        %v1113 = vunpack.c.l.b16 %v1081
        %v1114 = vunpack.c.l.b16 %v1082
        %v1115 = vunpack.c.l.b16 %v1083
        %v1116 = vunpack.c.l.b16 %v1084
        %v1117 = vunpack.c.l.b16 %v1085
        %v1118 = vunpack.c.l.b16 %v1086
        %v1119 = vunpack.c.l.b16 %v1087
        %v1120 = vunpack.c.l.b16 %v1088
        %v1121 = vunpack.c.l.b16 %v1089
        %v1122 = vunpack.c.l.b16 %v1090
        %v1123 = vunpack.c.l.b16 %v1091
        %v1124 = vpack.c.b16 %v1109, %v1108
        %v1125 = vpack.c.b16 %v1111, %v1110
        %v1126 = vpack.c.b16 %v1113, %v1112
        %v1127 = vpack.c.b16 %v1115, %v1114
        %v1128 = vpack.c.b16 %v1117, %v1116
        %v1129 = vpack.c.b16 %v1119, %v1118
        %v1130 = vpack.c.b16 %v1121, %v1120
        %v1131 = vpack.c.b16 %v1123, %v1122
        %1140 = vmatprep.subr.bf16.mxu0 0
        %1141 = vmatpush1.bf16.msra.mxu0 %v1131
        %1142 = vmatprep.subr.bf16.mxu0 0
        %1143 = vmatpush1.bf16.msra.mxu0 %v1130
        %1144 = vmatprep.subr.bf16.mxu0 0
        %1145 = vmatpush1.bf16.msra.mxu0 %v1129
        %1146 = vmatprep.subr.bf16.mxu0 0
        %1147 = vmatpush1.bf16.msra.mxu0 %v1128
        %1148 = vmatprep.subr.bf16.mxu0 0
        %1149 = vmatpush1.bf16.msra.mxu0 %v1127
        %1150 = vmatprep.subr.bf16.mxu0 0
        %1151 = vmatpush1.bf16.msra.mxu0 %v1126
        %1152 = vmatprep.subr.bf16.mxu0 0
        %1153 = vmatpush1.bf16.msra.mxu0 %v1125
        %1154 = vmatprep.subr.bf16.mxu0 0
        %1155 = vmatpush1.bf16.msra.mxu0 %v1124
        %1156 = vmatprep.subr.bf16.mxu0 0
        %1157 = vmatpush2.bf16.msra.mxu0 0
        %1158 = vmatprep.subr.bf16.mxu0 0
        %1159 = vmatpush2.bf16.msra.mxu0 0
        %1160 = vmatprep.subr.bf16.mxu0 0
        %1161 = vmatpush2.bf16.msra.mxu0 0
        %1162 = vmatprep.subr.bf16.mxu0 0
        %1163 = vmatpush2.bf16.msra.mxu0 0
        %1164 = vmatprep.subr.bf16.mxu0 0
        %1165 = vmatpush2.bf16.msra.mxu0 0
        %1166 = vmatprep.subr.bf16.mxu0 0
        %1167 = vmatpush2.bf16.msra.mxu0 0
        %1168 = vmatprep.subr.bf16.mxu0 0
        %1169 = vmatpush2.bf16.msra.mxu0 0
        %1170 = vmatprep.subr.bf16.mxu0 0
        %1171 = vmatpush2.bf16.msra.mxu0 0
        %1172 = vmatprep.mubr.bf16.mxu0 0
        %1173 = vmatmul.mubr.bf16.gmra.mxu0 %v1075
        %v1174 = vpop.f32.mrf.mxu0
        %v1175 = vadd.f32 0.0, %v1174
        %v1176 = vpop.f32.mrf.mxu0
        %v1177 = vpop.f32.mrf.mxu0
        %v1178 = vpop.f32.mrf.mxu0
        %1179 = vdwg.mxu0
        %v1180 = vld [vmem:[%s735] sm:$0xf]
        %v1181 = vld [vmem:[%s735 + $0x4] sm:$0xf]
        %v1182 = vld [vmem:[%s735 + $0x8] sm:$0xf]
        %v1183 = vld [vmem:[%s735 + $0xc] sm:$0xf]
        %v1184 = vld [vmem:[%s735 + $0x10] sm:$0xf]
        %v1185 = vld [vmem:[%s735 + $0x14] sm:$0xf]
        %v1186 = vld [vmem:[%s735 + $0x18] sm:$0xf]
        %v1187 = vld [vmem:[%s735 + $0x1c] sm:$0xf]
        %v1188 = vld [vmem:[%s735 + $0x20] sm:$0xf]
        %v1189 = vld [vmem:[%s735 + $0x24] sm:$0xf]
        %v1190 = vld [vmem:[%s735 + $0x28] sm:$0xf]
        %v1191 = vld [vmem:[%s735 + $0x2c] sm:$0xf]
        %v1192 = vld [vmem:[%s735 + $0x30] sm:$0xf]
        %v1193 = vld [vmem:[%s735 + $0x34] sm:$0xf]
        %v1194 = vld [vmem:[%s735 + $0x38] sm:$0xf]
        %v1195 = vld [vmem:[%s735 + $0x3c] sm:$0xf]
        %v1212 = vunpack.c.l.b16 %v1180
        %v1213 = vunpack.c.l.b16 %v1181
        %v1214 = vunpack.c.l.b16 %v1182
        %v1215 = vunpack.c.l.b16 %v1183
        %v1216 = vunpack.c.l.b16 %v1184
        %v1217 = vunpack.c.l.b16 %v1185
        %v1218 = vunpack.c.l.b16 %v1186
        %v1219 = vunpack.c.l.b16 %v1187
        %v1220 = vunpack.c.l.b16 %v1188
        %v1221 = vunpack.c.l.b16 %v1189
        %v1222 = vunpack.c.l.b16 %v1190
        %v1223 = vunpack.c.l.b16 %v1191
        %v1224 = vunpack.c.l.b16 %v1192
        %v1225 = vunpack.c.l.b16 %v1193
        %v1226 = vunpack.c.l.b16 %v1194
        %v1227 = vunpack.c.l.b16 %v1195
        %v1228 = vpack.c.b16 %v1213, %v1212
        %v1229 = vpack.c.b16 %v1215, %v1214
        %v1230 = vpack.c.b16 %v1217, %v1216
        %v1231 = vpack.c.b16 %v1219, %v1218
        %v1232 = vpack.c.b16 %v1221, %v1220
        %v1233 = vpack.c.b16 %v1223, %v1222
        %v1234 = vpack.c.b16 %v1225, %v1224
        %v1235 = vpack.c.b16 %v1227, %v1226
        %1244 = vmatprep.subr.bf16.mxu0 0
        %1245 = vmatpush1.bf16.msra.mxu0 %v1235
        %1246 = vmatprep.subr.bf16.mxu0 0
        %1247 = vmatpush1.bf16.msra.mxu0 %v1234
        %1248 = vmatprep.subr.bf16.mxu0 0
        %1249 = vmatpush1.bf16.msra.mxu0 %v1233
        %1250 = vmatprep.subr.bf16.mxu0 0
        %1251 = vmatpush1.bf16.msra.mxu0 %v1232
        %1252 = vmatprep.subr.bf16.mxu0 0
        %1253 = vmatpush1.bf16.msra.mxu0 %v1231
        %1254 = vmatprep.subr.bf16.mxu0 0
        %1255 = vmatpush1.bf16.msra.mxu0 %v1230
        %1256 = vmatprep.subr.bf16.mxu0 0
        %1257 = vmatpush1.bf16.msra.mxu0 %v1229
        %1258 = vmatprep.subr.bf16.mxu0 0
        %1259 = vmatpush1.bf16.msra.mxu0 %v1228
        %1260 = vmatprep.subr.bf16.mxu0 0
        %1261 = vmatpush2.bf16.msra.mxu0 0
        %1262 = vmatprep.subr.bf16.mxu0 0
        %1263 = vmatpush2.bf16.msra.mxu0 0
        %1264 = vmatprep.subr.bf16.mxu0 0
        %1265 = vmatpush2.bf16.msra.mxu0 0
        %1266 = vmatprep.subr.bf16.mxu0 0
        %1267 = vmatpush2.bf16.msra.mxu0 0
        %1268 = vmatprep.subr.bf16.mxu0 0
        %1269 = vmatpush2.bf16.msra.mxu0 0
        %1270 = vmatprep.subr.bf16.mxu0 0
        %1271 = vmatpush2.bf16.msra.mxu0 0
        %1272 = vmatprep.subr.bf16.mxu0 0
        %1273 = vmatpush2.bf16.msra.mxu0 0
        %1274 = vmatprep.subr.bf16.mxu0 0
        %1275 = vmatpush2.bf16.msra.mxu0 0
        %1276 = vmatprep.mubr.bf16.mxu0 0
        %1277 = vmatmul.mubr.bf16.gmra.mxu0 %v1075
        %v1278 = vpop.f32.mrf.mxu0
        %v1279 = vadd.f32 0.0, %v1278
        %v1280 = vpop.f32.mrf.mxu0
        %v1281 = vpop.f32.mrf.mxu0
        %v1282 = vpop.f32.mrf.mxu0
        %1283 = vdwg.mxu0
        %v1284 = vld [vmem:[%s740] sm:$0xf]
        %v1285 = vld [vmem:[%s740 + $0x4] sm:$0xf]
        %v1286 = vld [vmem:[%s740 + $0x8] sm:$0xf]
        %v1287 = vld [vmem:[%s740 + $0xc] sm:$0xf]
        %v1288 = vld [vmem:[%s740 + $0x10] sm:$0xf]
        %v1289 = vld [vmem:[%s740 + $0x14] sm:$0xf]
        %v1290 = vld [vmem:[%s740 + $0x18] sm:$0xf]
        %v1291 = vld [vmem:[%s740 + $0x1c] sm:$0xf]
        %v1292 = vld [vmem:[%s740 + $0x20] sm:$0xf]
        %v1293 = vld [vmem:[%s740 + $0x24] sm:$0xf]
        %v1294 = vld [vmem:[%s740 + $0x28] sm:$0xf]
        %v1295 = vld [vmem:[%s740 + $0x2c] sm:$0xf]
        %v1296 = vld [vmem:[%s740 + $0x30] sm:$0xf]
        %v1297 = vld [vmem:[%s740 + $0x34] sm:$0xf]
        %v1298 = vld [vmem:[%s740 + $0x38] sm:$0xf]
        %v1299 = vld [vmem:[%s740 + $0x3c] sm:$0xf]
        %v1316 = vunpack.c.l.b16 %v1284
        %v1317 = vunpack.c.l.b16 %v1285
        %v1318 = vunpack.c.l.b16 %v1286
        %v1319 = vunpack.c.l.b16 %v1287
        %v1320 = vunpack.c.l.b16 %v1288
        %v1321 = vunpack.c.l.b16 %v1289
        %v1322 = vunpack.c.l.b16 %v1290
        %v1323 = vunpack.c.l.b16 %v1291
        %v1324 = vunpack.c.l.b16 %v1292
        %v1325 = vunpack.c.l.b16 %v1293
        %v1326 = vunpack.c.l.b16 %v1294
        %v1327 = vunpack.c.l.b16 %v1295
        %v1328 = vunpack.c.l.b16 %v1296
        %v1329 = vunpack.c.l.b16 %v1297
        %v1330 = vunpack.c.l.b16 %v1298
        %v1331 = vunpack.c.l.b16 %v1299
        %v1332 = vpack.c.b16 %v1317, %v1316
        %v1333 = vpack.c.b16 %v1319, %v1318
        %v1334 = vpack.c.b16 %v1321, %v1320
        %v1335 = vpack.c.b16 %v1323, %v1322
        %v1336 = vpack.c.b16 %v1325, %v1324
        %v1337 = vpack.c.b16 %v1327, %v1326
        %v1338 = vpack.c.b16 %v1329, %v1328
        %v1339 = vpack.c.b16 %v1331, %v1330
        %1348 = vmatprep.subr.bf16.mxu0 0
        %1349 = vmatpush1.bf16.msra.mxu0 %v1339
        %1350 = vmatprep.subr.bf16.mxu0 0
        %1351 = vmatpush1.bf16.msra.mxu0 %v1338
        %1352 = vmatprep.subr.bf16.mxu0 0
        %1353 = vmatpush1.bf16.msra.mxu0 %v1337
        %1354 = vmatprep.subr.bf16.mxu0 0
        %1355 = vmatpush1.bf16.msra.mxu0 %v1336
        %1356 = vmatprep.subr.bf16.mxu0 0
        %1357 = vmatpush1.bf16.msra.mxu0 %v1335
        %1358 = vmatprep.subr.bf16.mxu0 0
        %1359 = vmatpush1.bf16.msra.mxu0 %v1334
        %1360 = vmatprep.subr.bf16.mxu0 0
        %1361 = vmatpush1.bf16.msra.mxu0 %v1333
        %1362 = vmatprep.subr.bf16.mxu0 0
        %1363 = vmatpush1.bf16.msra.mxu0 %v1332
        %1364 = vmatprep.subr.bf16.mxu0 0
        %1365 = vmatpush2.bf16.msra.mxu0 0
        %1366 = vmatprep.subr.bf16.mxu0 0
        %1367 = vmatpush2.bf16.msra.mxu0 0
        %1368 = vmatprep.subr.bf16.mxu0 0
        %1369 = vmatpush2.bf16.msra.mxu0 0
        %1370 = vmatprep.subr.bf16.mxu0 0
        %1371 = vmatpush2.bf16.msra.mxu0 0
        %1372 = vmatprep.subr.bf16.mxu0 0
        %1373 = vmatpush2.bf16.msra.mxu0 0
        %1374 = vmatprep.subr.bf16.mxu0 0
        %1375 = vmatpush2.bf16.msra.mxu0 0
        %1376 = vmatprep.subr.bf16.mxu0 0
        %1377 = vmatpush2.bf16.msra.mxu0 0
        %1378 = vmatprep.subr.bf16.mxu0 0
        %1379 = vmatpush2.bf16.msra.mxu0 0
        %1380 = vmatprep.mubr.bf16.mxu0 0
        %1381 = vmatmul.mubr.bf16.gmra.mxu0 %v1075
        %v1382 = vpop.f32.mrf.mxu0
        %v1383 = vadd.f32 0.0, %v1382
        %v1384 = vpop.f32.mrf.mxu0
        %v1385 = vpop.f32.mrf.mxu0
        %v1386 = vpop.f32.mrf.mxu0
        %1387 = vdwg.mxu0
        %v1388 = vpack.c.bf16 %v1175, %v1175
        %v1389 = vld [vmem:[%s744] sm:$0xf]
        %v1390 = vld [vmem:[%s747] sm:$0x1]
        %v1392 = vlaneseq
        %v1393 = vshrl.u32 %v1392, 7
        %v1394 = vsub.s32 0, %v1393
        %v1395 = vrot.slane %v1390, %v1394
        %v1398 = vsel %vm918, %v1388, 0
        %v1401 = vsel %vm922, %v1389, 0
        %1403 = vmatprep.subr.bf16.mxu0 0
        %1404 = vmatpush1.bf16.msra.mxu0 0
        %1405 = vmatprep.subr.bf16.mxu0 0
        %1406 = vmatpush1.bf16.msra.mxu0 0
        %1407 = vmatprep.subr.bf16.mxu0 0
        %1408 = vmatpush1.bf16.msra.mxu0 0
        %1409 = vmatprep.subr.bf16.mxu0 0
        %1410 = vmatpush1.bf16.msra.mxu0 0
        %1411 = vmatprep.subr.bf16.mxu0 0
        %1412 = vmatpush1.bf16.msra.mxu0 0
        %1413 = vmatprep.subr.bf16.mxu0 0
        %1414 = vmatpush1.bf16.msra.mxu0 0
        %1415 = vmatprep.subr.bf16.mxu0 0
        %1416 = vmatpush1.bf16.msra.mxu0 0
        %1417 = vmatprep.subr.bf16.mxu0 0
        %1418 = vmatpush1.bf16.msra.mxu0 %v1401
        %1419 = vmatprep.subr.bf16.mxu0 0
        %1420 = vmatpush2.bf16.msra.mxu0 0
        %1421 = vmatprep.subr.bf16.mxu0 0
        %1422 = vmatpush2.bf16.msra.mxu0 0
        %1423 = vmatprep.subr.bf16.mxu0 0
        %1424 = vmatpush2.bf16.msra.mxu0 0
        %1425 = vmatprep.subr.bf16.mxu0 0
        %1426 = vmatpush2.bf16.msra.mxu0 0
        %1427 = vmatprep.subr.bf16.mxu0 0
        %1428 = vmatpush2.bf16.msra.mxu0 0
        %1429 = vmatprep.subr.bf16.mxu0 0
        %1430 = vmatpush2.bf16.msra.mxu0 0
        %1431 = vmatprep.subr.bf16.mxu0 0
        %1432 = vmatpush2.bf16.msra.mxu0 0
        %1433 = vmatprep.subr.bf16.mxu0 0
        %1434 = vmatpush2.bf16.msra.mxu0 0
        %1435 = vmatprep.mubr.bf16.mxu0 0
        %1436 = vmatmul.mubr.bf16.gmra.mxu0 %v1398
        %v1437 = vpop.f32.mrf.mxu0
        %v1438 = vadd.f32 %v1395, %v1437
        %v1439 = vpop.f32.mrf.mxu0
        %v1440 = vpop.f32.mrf.mxu0
        %v1441 = vpop.f32.mrf.mxu0
        %1442 = vdwg.mxu0
        %v1443 = vmax.f32 %v1438, 0.0
        %v1444 = vand.u32 2147483647, %v1438
        %v1445 = vsub.f32 0.0, %v1444
        %v1446 = vmul.f32 %v1445, 1.442695
        %v1447 = vpow.pop %v1446
        %v1448 = vadd.f32 %v1447, 1.0
        %v1449 = vlog2.pop %v1448
        %v1450 = vmul.f32 %v1449, 0.6931472
        %v1451 = vadd.f32 %v1443, %v1450
        %v1452 = vld [vmem:[%s752] sm:$0xff]
        %v1453 = vld [vmem:[%s752 + $0x8] sm:$0xff]
        %v1454 = vld [vmem:[%s755] sm:$0x1]
        %v1455 = vlaneseq
        %v1456 = vshrl.u32 %v1455, 7
        %v1457 = vsub.s32 0, %v1456
        %v1458 = vrot.slane %v1451, %v1457
        %v1459 = vmul.f32 %v1458, %v1452
        %v1460 = vmul.f32 %v1458, %v1453
        %v1461 = vmul.f32 %v1459, 1.442695
        %v1462 = vpow.pop %v1461
        %v1463 = vmul.f32 %v1460, 1.442695
        %v1464 = vpow.pop %v1463
        %v1465 = vmul.f32 %v1451, %v1074
        %v1466 = vlaneseq
        %v1467 = vshrl.u32 %v1466, 7
        %v1468 = vsub.s32 0, %v1467
        %v1469 = vrot.slane %v1279, %v1468
        %1471 = vbcast.lane.b32.xlu0 %v1469, 256
        %v1472 = vpop.permute.xlu0 %1471
        %s1474 = sor.u32 256, 8
        %1475 = vbcast.lane.b32.xlu0 %v1469, %s1474
        %v1476 = vpop.permute.xlu0 %1475
        %v1477 = vlaneseq
        %v1478 = vshrl.u32 %v1477, 7
        %v1479 = vsub.s32 0, %v1478
        %v1480 = vrot.slane %v1465, %v1479
        %v1481 = vmul.f32 %v1480, %v1472
        %v1482 = vmul.f32 %v1480, %v1476
        %v1483 = vmul.f32 %v1462, 0.0
        %v1484 = vmul.f32 %v1464, 0.0
        %v1485 = vadd.f32 %v1483, %v1481
        %v1486 = vadd.f32 %v1484, %v1482
        %v1487 = vlaneseq
        %v1488 = vshrl.u32 %v1487, 7
        %v1489 = vsub.s32 0, %v1488
        %v1490 = vrot.slane %v1383, %v1489
        %1492 = vbcast.lane.b32.xlu0 %v1490, 256
        %v1493 = vpop.permute.xlu0 %1492
        %s1495 = sor.u32 256, 8
        %1496 = vbcast.lane.b32.xlu0 %v1490, %s1495
        %v1497 = vpop.permute.xlu0 %1496
        %v1498 = vmul.f32 %v1493, %v1485
        %v1499 = vmul.f32 %v1497, %v1486
        %v1500 = vadd.f32 %v1498, %v1499
        %v1501 = vrot.slane %v1500, 4
        %v1502 = vadd.f32 %v1500, %v1501
        %v1503 = vrot.slane %v1502, 2
        %v1504 = vadd.f32 %v1502, %v1503
        %v1505 = vrot.slane %v1504, 1
        %v1506 = vadd.f32 %v1504, %v1505
        %v1507 = vlaneseq
        %v1508 = vshrl.u32 %v1507, 7
        %v1509 = vsub.s32 1, %v1508
        %v1510 = vrot.slane %v1451, %v1509
        %v1511 = vmul.f32 %v1510, %v1452
        %v1512 = vmul.f32 %v1510, %v1453
        %v1513 = vmul.f32 %v1511, 1.442695
        %v1514 = vpow.pop %v1513
        %v1515 = vmul.f32 %v1512, 1.442695
        %v1516 = vpow.pop %v1515
        %v1517 = vlaneseq
        %v1518 = vshrl.u32 %v1517, 7
        %v1519 = vsub.s32 1, %v1518
        %v1520 = vrot.slane %v1279, %v1519
        %1522 = vbcast.lane.b32.xlu0 %v1520, 256
        %v1523 = vpop.permute.xlu0 %1522
        %s1525 = sor.u32 256, 8
        %1526 = vbcast.lane.b32.xlu0 %v1520, %s1525
        %v1527 = vpop.permute.xlu0 %1526
        %v1528 = vlaneseq
        %v1529 = vshrl.u32 %v1528, 7
        %v1530 = vsub.s32 1, %v1529
        %v1531 = vrot.slane %v1465, %v1530
        %v1532 = vmul.f32 %v1531, %v1523
        %v1533 = vmul.f32 %v1531, %v1527
        %v1534 = vmul.f32 %v1514, %v1485
        %v1535 = vmul.f32 %v1516, %v1486
        %v1536 = vadd.f32 %v1534, %v1532
        %v1537 = vadd.f32 %v1535, %v1533
        %v1538 = vlaneseq
        %v1539 = vshrl.u32 %v1538, 7
        %v1540 = vsub.s32 1, %v1539
        %v1541 = vrot.slane %v1383, %v1540
        %1543 = vbcast.lane.b32.xlu0 %v1541, 256
        %v1544 = vpop.permute.xlu0 %1543
        %s1546 = sor.u32 256, 8
        %1547 = vbcast.lane.b32.xlu0 %v1541, %s1546
        %v1548 = vpop.permute.xlu0 %1547
        %v1549 = vmul.f32 %v1544, %v1536
        %v1550 = vmul.f32 %v1548, %v1537
        %v1551 = vadd.f32 %v1549, %v1550
        %v1552 = vrot.slane %v1551, 4
        %v1553 = vadd.f32 %v1551, %v1552
        %v1554 = vrot.slane %v1553, 2
        %v1555 = vadd.f32 %v1553, %v1554
        %v1556 = vrot.slane %v1555, 1
        %v1557 = vadd.f32 %v1555, %v1556
        %v1558 = vlaneseq
        %v1559 = vshrl.u32 %v1558, 7
        %v1560 = vsub.s32 2, %v1559
        %v1561 = vrot.slane %v1451, %v1560
        %v1562 = vmul.f32 %v1561, %v1452
        %v1563 = vmul.f32 %v1561, %v1453
        %v1564 = vmul.f32 %v1562, 1.442695
        %v1565 = vpow.pop %v1564
        %v1566 = vmul.f32 %v1563, 1.442695
        %v1567 = vpow.pop %v1566
        %v1568 = vlaneseq
        %v1569 = vshrl.u32 %v1568, 7
        %v1570 = vsub.s32 2, %v1569
        %v1571 = vrot.slane %v1279, %v1570
        %1573 = vbcast.lane.b32.xlu0 %v1571, 256
        %v1574 = vpop.permute.xlu0 %1573
        %s1576 = sor.u32 256, 8
        %1577 = vbcast.lane.b32.xlu0 %v1571, %s1576
        %v1578 = vpop.permute.xlu0 %1577
        %v1579 = vlaneseq
        %v1580 = vshrl.u32 %v1579, 7
        %v1581 = vsub.s32 2, %v1580
        %v1582 = vrot.slane %v1465, %v1581
        %v1583 = vmul.f32 %v1582, %v1574
        %v1584 = vmul.f32 %v1582, %v1578
        %v1585 = vmul.f32 %v1565, %v1536
        %v1586 = vmul.f32 %v1567, %v1537
        %v1587 = vadd.f32 %v1585, %v1583
        %v1588 = vadd.f32 %v1586, %v1584
        %v1589 = vlaneseq
        %v1590 = vshrl.u32 %v1589, 7
        %v1591 = vsub.s32 2, %v1590
        %v1592 = vrot.slane %v1383, %v1591
        %1594 = vbcast.lane.b32.xlu0 %v1592, 256
        %v1595 = vpop.permute.xlu0 %1594
        %s1597 = sor.u32 256, 8
        %1598 = vbcast.lane.b32.xlu0 %v1592, %s1597
        %v1599 = vpop.permute.xlu0 %1598
        %v1600 = vmul.f32 %v1595, %v1587
        %v1601 = vmul.f32 %v1599, %v1588
        %v1602 = vadd.f32 %v1600, %v1601
        %v1603 = vrot.slane %v1602, 4
        %v1604 = vadd.f32 %v1602, %v1603
        %v1605 = vrot.slane %v1604, 2
        %v1606 = vadd.f32 %v1604, %v1605
        %v1607 = vrot.slane %v1606, 1
        %v1608 = vadd.f32 %v1606, %v1607
        %v1609 = vlaneseq
        %v1610 = vshrl.u32 %v1609, 7
        %v1611 = vsub.s32 3, %v1610
        %v1612 = vrot.slane %v1451, %v1611
        %v1613 = vmul.f32 %v1612, %v1452
        %v1614 = vmul.f32 %v1612, %v1453
        %v1615 = vmul.f32 %v1613, 1.442695
        %v1616 = vpow.pop %v1615
        %v1617 = vmul.f32 %v1614, 1.442695
        %v1618 = vpow.pop %v1617
        %v1619 = vlaneseq
        %v1620 = vshrl.u32 %v1619, 7
        %v1621 = vsub.s32 3, %v1620
        %v1622 = vrot.slane %v1279, %v1621
        %1624 = vbcast.lane.b32.xlu0 %v1622, 256
        %v1625 = vpop.permute.xlu0 %1624
        %s1627 = sor.u32 256, 8
        %1628 = vbcast.lane.b32.xlu0 %v1622, %s1627
        %v1629 = vpop.permute.xlu0 %1628
        %v1630 = vlaneseq
        %v1631 = vshrl.u32 %v1630, 7
        %v1632 = vsub.s32 3, %v1631
        %v1633 = vrot.slane %v1465, %v1632
        %v1634 = vmul.f32 %v1633, %v1625
        %v1635 = vmul.f32 %v1633, %v1629
        %v1636 = vmul.f32 %v1616, %v1587
        %v1637 = vmul.f32 %v1618, %v1588
        %v1638 = vadd.f32 %v1636, %v1634
        %v1639 = vadd.f32 %v1637, %v1635
        %v1640 = vlaneseq
        %v1641 = vshrl.u32 %v1640, 7
        %v1642 = vsub.s32 3, %v1641
        %v1643 = vrot.slane %v1383, %v1642
        %1645 = vbcast.lane.b32.xlu0 %v1643, 256
        %v1646 = vpop.permute.xlu0 %1645
        %s1648 = sor.u32 256, 8
        %1649 = vbcast.lane.b32.xlu0 %v1643, %s1648
        %v1650 = vpop.permute.xlu0 %1649
        %v1651 = vmul.f32 %v1646, %v1638
        %v1652 = vmul.f32 %v1650, %v1639
        %v1653 = vadd.f32 %v1651, %v1652
        %v1654 = vrot.slane %v1653, 4
        %v1655 = vadd.f32 %v1653, %v1654
        %v1656 = vrot.slane %v1655, 2
        %v1657 = vadd.f32 %v1655, %v1656
        %v1658 = vrot.slane %v1657, 1
        %v1659 = vadd.f32 %v1657, %v1658
        %v1660 = vlaneseq
        %v1661 = vshrl.u32 %v1660, 7
        %v1662 = vsub.s32 4, %v1661
        %v1663 = vrot.slane %v1451, %v1662
        %v1664 = vmul.f32 %v1663, %v1452
        %v1665 = vmul.f32 %v1663, %v1453
        %v1666 = vmul.f32 %v1664, 1.442695
        %v1667 = vpow.pop %v1666
        %v1668 = vmul.f32 %v1665, 1.442695
        %v1669 = vpow.pop %v1668
        %v1670 = vlaneseq
        %v1671 = vshrl.u32 %v1670, 7
        %v1672 = vsub.s32 4, %v1671
        %v1673 = vrot.slane %v1279, %v1672
        %1675 = vbcast.lane.b32.xlu0 %v1673, 256
        %v1676 = vpop.permute.xlu0 %1675
        %s1678 = sor.u32 256, 8
        %1679 = vbcast.lane.b32.xlu0 %v1673, %s1678
        %v1680 = vpop.permute.xlu0 %1679
        %v1681 = vlaneseq
        %v1682 = vshrl.u32 %v1681, 7
        %v1683 = vsub.s32 4, %v1682
        %v1684 = vrot.slane %v1465, %v1683
        %v1685 = vmul.f32 %v1684, %v1676
        %v1686 = vmul.f32 %v1684, %v1680
        %v1687 = vmul.f32 %v1667, %v1638
        %v1688 = vmul.f32 %v1669, %v1639
        %v1689 = vadd.f32 %v1687, %v1685
        %v1690 = vadd.f32 %v1688, %v1686
        %v1691 = vlaneseq
        %v1692 = vshrl.u32 %v1691, 7
        %v1693 = vsub.s32 4, %v1692
        %v1694 = vrot.slane %v1383, %v1693
        %1696 = vbcast.lane.b32.xlu0 %v1694, 256
        %v1697 = vpop.permute.xlu0 %1696
        %s1699 = sor.u32 256, 8
        %1700 = vbcast.lane.b32.xlu0 %v1694, %s1699
        %v1701 = vpop.permute.xlu0 %1700
        %v1702 = vmul.f32 %v1697, %v1689
        %v1703 = vmul.f32 %v1701, %v1690
        %v1704 = vadd.f32 %v1702, %v1703
        %v1705 = vrot.slane %v1704, 4
        %v1706 = vadd.f32 %v1704, %v1705
        %v1707 = vrot.slane %v1706, 2
        %v1708 = vadd.f32 %v1706, %v1707
        %v1709 = vrot.slane %v1708, 1
        %v1710 = vadd.f32 %v1708, %v1709
        %v1711 = vlaneseq
        %v1712 = vshrl.u32 %v1711, 7
        %v1713 = vsub.s32 5, %v1712
        %v1714 = vrot.slane %v1451, %v1713
        %v1715 = vmul.f32 %v1714, %v1452
        %v1716 = vmul.f32 %v1714, %v1453
        %v1717 = vmul.f32 %v1715, 1.442695
        %v1718 = vpow.pop %v1717
        %v1719 = vmul.f32 %v1716, 1.442695
        %v1720 = vpow.pop %v1719
        %v1721 = vlaneseq
        %v1722 = vshrl.u32 %v1721, 7
        %v1723 = vsub.s32 5, %v1722
        %v1724 = vrot.slane %v1279, %v1723
        %1726 = vbcast.lane.b32.xlu0 %v1724, 256
        %v1727 = vpop.permute.xlu0 %1726
        %s1729 = sor.u32 256, 8
        %1730 = vbcast.lane.b32.xlu0 %v1724, %s1729
        %v1731 = vpop.permute.xlu0 %1730
        %v1732 = vlaneseq
        %v1733 = vshrl.u32 %v1732, 7
        %v1734 = vsub.s32 5, %v1733
        %v1735 = vrot.slane %v1465, %v1734
        %v1736 = vmul.f32 %v1735, %v1727
        %v1737 = vmul.f32 %v1735, %v1731
        %v1738 = vmul.f32 %v1718, %v1689
        %v1739 = vmul.f32 %v1720, %v1690
        %v1740 = vadd.f32 %v1738, %v1736
        %v1741 = vadd.f32 %v1739, %v1737
        %v1742 = vlaneseq
        %v1743 = vshrl.u32 %v1742, 7
        %v1744 = vsub.s32 5, %v1743
        %v1745 = vrot.slane %v1383, %v1744
        %1747 = vbcast.lane.b32.xlu0 %v1745, 256
        %v1748 = vpop.permute.xlu0 %1747
        %s1750 = sor.u32 256, 8
        %1751 = vbcast.lane.b32.xlu0 %v1745, %s1750
        %v1752 = vpop.permute.xlu0 %1751
        %v1753 = vmul.f32 %v1748, %v1740
        %v1754 = vmul.f32 %v1752, %v1741
        %v1755 = vadd.f32 %v1753, %v1754
        %v1756 = vrot.slane %v1755, 4
        %v1757 = vadd.f32 %v1755, %v1756
        %v1758 = vrot.slane %v1757, 2
        %v1759 = vadd.f32 %v1757, %v1758
        %v1760 = vrot.slane %v1759, 1
        %v1761 = vadd.f32 %v1759, %v1760
        %v1762 = vlaneseq
        %v1763 = vshrl.u32 %v1762, 7
        %v1764 = vsub.s32 6, %v1763
        %v1765 = vrot.slane %v1451, %v1764
        %v1766 = vmul.f32 %v1765, %v1452
        %v1767 = vmul.f32 %v1765, %v1453
        %v1768 = vmul.f32 %v1766, 1.442695
        %v1769 = vpow.pop %v1768
        %v1770 = vmul.f32 %v1767, 1.442695
        %v1771 = vpow.pop %v1770
        %v1772 = vlaneseq
        %v1773 = vshrl.u32 %v1772, 7
        %v1774 = vsub.s32 6, %v1773
        %v1775 = vrot.slane %v1279, %v1774
        %1777 = vbcast.lane.b32.xlu0 %v1775, 256
        %v1778 = vpop.permute.xlu0 %1777
        %s1780 = sor.u32 256, 8
        %1781 = vbcast.lane.b32.xlu0 %v1775, %s1780
        %v1782 = vpop.permute.xlu0 %1781
        %v1783 = vlaneseq
        %v1784 = vshrl.u32 %v1783, 7
        %v1785 = vsub.s32 6, %v1784
        %v1786 = vrot.slane %v1465, %v1785
        %v1787 = vmul.f32 %v1786, %v1778
        %v1788 = vmul.f32 %v1786, %v1782
        %v1789 = vmul.f32 %v1769, %v1740
        %v1790 = vmul.f32 %v1771, %v1741
        %v1791 = vadd.f32 %v1789, %v1787
        %v1792 = vadd.f32 %v1790, %v1788
        %v1793 = vlaneseq
        %v1794 = vshrl.u32 %v1793, 7
        %v1795 = vsub.s32 6, %v1794
        %v1796 = vrot.slane %v1383, %v1795
        %1798 = vbcast.lane.b32.xlu0 %v1796, 256
        %v1799 = vpop.permute.xlu0 %1798
        %s1801 = sor.u32 256, 8
        %1802 = vbcast.lane.b32.xlu0 %v1796, %s1801
        %v1803 = vpop.permute.xlu0 %1802
        %v1804 = vmul.f32 %v1799, %v1791
        %v1805 = vmul.f32 %v1803, %v1792
        %v1806 = vadd.f32 %v1804, %v1805
        %v1807 = vrot.slane %v1806, 4
        %v1808 = vadd.f32 %v1806, %v1807
        %v1809 = vrot.slane %v1808, 2
        %v1810 = vadd.f32 %v1808, %v1809
        %v1811 = vrot.slane %v1810, 1
        %v1812 = vadd.f32 %v1810, %v1811
        %v1813 = vlaneseq
        %v1814 = vshrl.u32 %v1813, 7
        %v1815 = vsub.s32 7, %v1814
        %v1816 = vrot.slane %v1451, %v1815
        %v1817 = vmul.f32 %v1816, %v1452
        %v1818 = vmul.f32 %v1816, %v1453
        %v1819 = vmul.f32 %v1817, 1.442695
        %v1820 = vpow.pop %v1819
        %v1821 = vmul.f32 %v1818, 1.442695
        %v1822 = vpow.pop %v1821
        %v1823 = vlaneseq
        %v1824 = vshrl.u32 %v1823, 7
        %v1825 = vsub.s32 7, %v1824
        %v1826 = vrot.slane %v1279, %v1825
        %1828 = vbcast.lane.b32.xlu0 %v1826, 256
        %v1829 = vpop.permute.xlu0 %1828
        %s1831 = sor.u32 256, 8
        %1832 = vbcast.lane.b32.xlu0 %v1826, %s1831
        %v1833 = vpop.permute.xlu0 %1832
        %v1834 = vlaneseq
        %v1835 = vshrl.u32 %v1834, 7
        %v1836 = vsub.s32 7, %v1835
        %v1837 = vrot.slane %v1465, %v1836
        %v1838 = vmul.f32 %v1837, %v1829
        %v1839 = vmul.f32 %v1837, %v1833
        %v1840 = vmul.f32 %v1820, %v1791
        %v1841 = vmul.f32 %v1822, %v1792
        %v1842 = vadd.f32 %v1840, %v1838
        %v1843 = vadd.f32 %v1841, %v1839
        %v1844 = vlaneseq
        %v1845 = vshrl.u32 %v1844, 7
        %v1846 = vsub.s32 7, %v1845
        %v1847 = vrot.slane %v1383, %v1846
        %1849 = vbcast.lane.b32.xlu0 %v1847, 256
        %v1850 = vpop.permute.xlu0 %1849
        %s1852 = sor.u32 256, 8
        %1853 = vbcast.lane.b32.xlu0 %v1847, %s1852
        %v1854 = vpop.permute.xlu0 %1853
        %v1855 = vmul.f32 %v1850, %v1842
        %v1856 = vmul.f32 %v1854, %v1843
        %v1857 = vadd.f32 %v1855, %v1856
        %v1858 = vrot.slane %v1857, 4
        %v1859 = vadd.f32 %v1857, %v1858
        %v1860 = vrot.slane %v1859, 2
        %v1861 = vadd.f32 %v1859, %v1860
        %v1862 = vrot.slane %v1861, 1
        %v1863 = vadd.f32 %v1861, %v1862
        %vm1864 = vcmask 1040384
        %v1865 = vsel %vm1864, %v1506, %v1557
        %vm1866 = vcmask 1041408
        %v1867 = vsel %vm1866, %v1865, %v1608
        %vm1868 = vcmask 1042432
        %v1869 = vsel %vm1868, %v1867, %v1659
        %v1870 = vsel %vm922, %v1869, %v1710
        %vm1871 = vcmask 1044480
        %v1872 = vsel %vm1871, %v1870, %v1761
        %vm1873 = vcmask 1045504
        %v1874 = vsel %vm1873, %v1872, %v1812
        %vm1875 = vcmask 1046528
        %v1876 = vsel %vm1875, %v1874, %v1863
        %v1878 = vlaneseq
        %v1879 = vshrl.u32 %v1878, 7
        %v1880 = vsub.s32 0, %v1879
        %v1881 = vrot.slane %v1454, %v1880
        %v1883 = vmul.f32 %v1881, %v1074
        %v1884 = vadd.f32 %v1876, %v1883
        %v1885 = vsub.f32 0.0, %v899
        %v1886 = vmul.f32 %v1885, 1.442695
        %v1887 = vpow.pop %v1886
        %v1888 = vadd.f32 %v1887, 1.0
        %v1889 = vrcp.pop %v1888
        %v1890 = vmul.f32 1.0, %v1889
        %v1891 = vmul.f32 %v899, %v1890
        %v1892 = vmul.f32 %v1884, %v1891
        %v1893 = vadd.f32 %v1892, %v791
        %v1894 = vpack.c.bf16 %v1893, %v1893
        %1895 = vmatprep.subr.bf16.mxu0 0
        %1896 = vmatpush1.bf16.msra.mxu0 %v855
        %1897 = vmatprep.subr.bf16.mxu0 0
        %1898 = vmatpush1.bf16.msra.mxu0 %v854
        %1899 = vmatprep.subr.bf16.mxu0 0
        %1900 = vmatpush1.bf16.msra.mxu0 %v853
        %1901 = vmatprep.subr.bf16.mxu0 0
        %1902 = vmatpush1.bf16.msra.mxu0 %v852
        %1903 = vmatprep.subr.bf16.mxu0 0
        %1904 = vmatpush1.bf16.msra.mxu0 %v851
        %1905 = vmatprep.subr.bf16.mxu0 0
        %1906 = vmatpush1.bf16.msra.mxu0 %v850
        %1907 = vmatprep.subr.bf16.mxu0 0
        %1908 = vmatpush1.bf16.msra.mxu0 %v849
        %1909 = vmatprep.subr.bf16.mxu0 0
        %1910 = vmatpush1.bf16.msra.mxu0 %v848
        %1911 = vmatprep.subr.bf16.mxu0 0
        %1912 = vmatpush2.bf16.msra.mxu0 0
        %1913 = vmatprep.subr.bf16.mxu0 0
        %1914 = vmatpush2.bf16.msra.mxu0 0
        %1915 = vmatprep.subr.bf16.mxu0 0
        %1916 = vmatpush2.bf16.msra.mxu0 0
        %1917 = vmatprep.subr.bf16.mxu0 0
        %1918 = vmatpush2.bf16.msra.mxu0 0
        %1919 = vmatprep.subr.bf16.mxu0 0
        %1920 = vmatpush2.bf16.msra.mxu0 0
        %1921 = vmatprep.subr.bf16.mxu0 0
        %1922 = vmatpush2.bf16.msra.mxu0 0
        %1923 = vmatprep.subr.bf16.mxu0 0
        %1924 = vmatpush2.bf16.msra.mxu0 0
        %1925 = vmatprep.subr.bf16.mxu0 0
        %1926 = vmatpush2.bf16.msra.mxu0 0
        %1927 = vmatprep.mubr.bf16.mxu0 0
        %1928 = vmatmul.mubr.bf16.gmra.mxu0 %v1894
        %v1929 = vpop.f32.mrf.mxu0
        %v1930 = vadd.f32 %v814, %v1929
        %v1931 = vpop.f32.mrf.mxu0
        %v1932 = vpop.f32.mrf.mxu0
        %v1933 = vpop.f32.mrf.mxu0
        %1934 = vdwg.mxu0
        %1935 = vst [vmem:[#allocation2] sm:$0xff] %v1930
        %p1936 = scmp.eq.s32.totalorder %s35, 1
        // Predicated region
        $region89: #{cobra_forward.1} parent=83 // pred_check
          %p1937 = pneg %p1936
        $region90: #{cobra_forward.1} parent=83 // pred_check_branch
          %1939 = sbr.rel (%p1937) target = $region92
        $region91: #{cobra_forward.1} parent=83 // pred_region
          %1940 = vadd.xlane.f32.xlu0 %v1930
          %v1941 = vpop.xlane.xlu0 %1940
          %v1942 = vrcp.pop 128.0
          %v1943 = vmul.f32 %v1941, %v1942
          %v1944 = vsub.f32 %v1930, %v1943
          %v1945 = vmul.f32 %v1944, %v1944
          %1946 = vadd.xlane.f32.xlu0 %v1945
          %v1947 = vpop.xlane.xlu0 %1946
          %v1948 = vmul.f32 %v1947, %v1942
          %v1949 = vadd.f32 %v1948, 1e-05
          %v1950 = vrsqrt.pop %v1949
          %v1951 = vmul.f32 %v1944, %v1950
          %v1953 = vlaneseq
          %v1954 = vshrl.u32 %v1953, 7
          %v1955 = vsub.s32 0, %v1954
          %v1956 = vrot.slane %v757, %v1955
          %v1958 = vmul.f32 %v1951, %v1956
          %v1960 = vlaneseq
          %v1961 = vshrl.u32 %v1960, 7
          %v1962 = vsub.s32 0, %v1961
          %v1963 = vrot.slane %v758, %v1962
          %v1965 = vadd.f32 %v1958, %v1963
          %1966 = vst [vmem:[%s697] sm:$0xff] %v1965
        $region92: #{cobra_forward.1} parent=83 // pred_fallthru
          _
        %s1967 = sand.u32 %s456, 1
        %s1968 = scalar_lea.sflag [#allocation4], %s1967
        %s1969 = sand.u32 %s456, 1
        %s1970 = smul.addr %s1969, 8
        %s1971 = scalar_lea.vmem [#allocation3], %s1970
        // Predicated region
        $region93: #{cobra_forward.1} parent=83 // pred_check
          %p1972 = pneg %p466
        $region94: #{cobra_forward.1} parent=83 // pred_check_branch
          %1974 = sbr.rel (%p1972) target = $region96
        $region95: #{cobra_forward.1} parent=83 // pred_region
          %s1976 = ssub.s32 128, 128
          %1977 = vsyncadd %s1968, %s1976
          %s1978 = smul.addr %s34, 128
          %s1979 = scalar_lea.hbm %s16, %s1978
          %s1981 = sshll.u32 %s1971, 4
          %s1982 = int_to_ptr.vmem [resolvable:$true] %s1981
          %1984 = dma.vmem_to_hbm [thread:$0]  %s1982, 128, %s1979, %s1968
        $region96: #{cobra_forward.1} parent=83 // pred_fallthru
          _
      $region84: #{cobra_forward.1} parent=5 // pred_fallthru
        _
      %p1985 = scmp.le.s32.totalorder 2, %s25
      // Predicated region
      $region97: #{cobra_forward.1} parent=5 // pred_check
        %p1986 = pneg %p1985
      $region98: #{cobra_forward.1} parent=5 // pred_check_branch
        %1988 = sbr.rel (%p1986) target = $region100
      $region99: #{cobra_forward.1} parent=5 // pred_region
        %s1989 = ssub.s32 %s25, 2
        // Predicated region
        $region101: #{cobra_forward.1} parent=99 // pred_check
          %p1990 = pneg %p472
        $region102: #{cobra_forward.1} parent=99 // pred_check_branch
          %1992 = sbr.rel (%p1990) target = $region104
        $region103: #{cobra_forward.1} parent=99 // pred_region
          %s1993 = sand.u32 %s457, 1
          %s1994 = scalar_lea.sflag [#allocation4], %s1993
          %s1995 = sand.u32 %s457, 1
          %s1996 = smul.addr %s1995, 8
          %s1997 = scalar_lea.vmem [#allocation3], %s1996
          %1998 = dma.done %s1994, 128
        $region104: #{cobra_forward.1} parent=99 // pred_fallthru
          _
      $region100: #{cobra_forward.1} parent=5 // pred_fallthru
        _
    $region6: #{cobra_forward.1} parent=1 // loop_footer
      %s29 = sadd.s32 1, %s25
    $region7: #{cobra_forward.1} parent=1 // loop_footer_branch
      %24 = sbr.rel target = $region3
    $region8: #{cobra_forward.1} parent=1 // loop_exit
      _
    %1999 = vsyncpa [#allocation4], 1
    %s2000 = scalar_lea.sflag [#allocation4], 1
    %2001 = vsyncpa %s2000, 1

</llo_original>
